<compile_context>
chip_gen: v6e
topology: v6e:2x2x1
jax: 0.10.0
libtpu: 0.0.40
codegen_flags: <defaults>
</compile_context>

<pallas_src>
import jax
import jax.numpy as jnp
from jax.experimental import pallas as pl
from jax.experimental.pallas import tpu as pltpu


def _erf(x):
    """Abramowitz-Stegun 7.1.26 erf approximation (max abs err 1.5e-7)."""
    p = 0.3275911
    a1, a2, a3, a4, a5 = (0.254829592, -0.284496736, 1.421413741,
                          -1.453152027, 1.061405429)
    z = jnp.abs(x)
    t = 1.0 / (1.0 + p * z)
    poly = t * (a1 + t * (a2 + t * (a3 + t * (a4 + t * a5))))
    e = 1.0 - poly * jnp.exp(-z * z)
    return jnp.where(x >= 0, e, -e)


def _gelu_exact(x):
    """Exact (erf-based) GELU, matching torch.nn.functional.gelu default."""
    return 0.5 * x * (1.0 + _erf(x * 0.7071067811865476))


def _mlp_kernel(x_ref, w1_ref, b1_ref, w2_ref, b2_ref, o_ref, acc_ref):
    # x_ref : (TM, H)    row tile of tokens
    # w1_ref: (H, TF)    fc1 weight slice      b1_ref: (1, TF)
    # w2_ref: (TF, H)    fc2 weight slice      b2_ref: (1, H)
    # o_ref : (TM, H)    output tile (resident across the ff/reduction axis)
    # acc_ref: (TM, H) f32 VMEM accumulator
    k = pl.program_id(1)

    @pl.when(k == 0)
    def _init():
        acc_ref[...] = jnp.zeros_like(acc_ref)

    # fc1 slice on the MXU, f32 accumulation.
    h = jnp.dot(x_ref[...], w1_ref[...], preferred_element_type=jnp.float32)
    h = h + b1_ref[...]
    h = _gelu_exact(h)                      # exact GELU (dropout = identity)
    # fc2 partial product, accumulated over mlp_dim tiles.
    acc_ref[...] += jnp.dot(h, w2_ref[...], preferred_element_type=jnp.float32)

    @pl.when(k == pl.num_programs(1) - 1)
    def _finalize():
        o_ref[...] = (acc_ref[...] + b2_ref[...]).astype(o_ref.dtype)


def mlp(x, w1, b1, w2, b2, *, block_m=128, block_f=None, interpret=False):
    """Fused Mlp forward.

    x : (..., hidden)
    w1: (hidden, mlp_dim)   == fc1.weight.T
    b1: (mlp_dim,)
    w2: (mlp_dim, hidden)   == fc2.weight.T
    b2: (hidden,)
    Dropout layers are identity (eval mode).
    """
    orig_shape = x.shape
    hidden = orig_shape[-1]
    mlp_dim = w1.shape[-1]
    assert w1.shape == (hidden, mlp_dim), w1.shape
    assert w2.shape == (mlp_dim, hidden), w2.shape

    rows = 1
    for s in orig_shape[:-1]:
        rows *= s
    x2 = x.reshape(rows, hidden)

    # Row tile (lane-dense M). Pad token count up to a multiple of tm.
    tm = min(block_m, max(8, rows))
    rows_p = pl.cdiv(rows, tm) * tm
    if rows_p != rows:
        x2 = jnp.pad(x2, ((0, rows_p - rows), (0, 0)))

    # mlp_dim tile = fused fc2 contraction tile (reduction axis, kept last).
    if block_f is None:
        block_f = next((c for c in (512, 256, 128) if mlp_dim % c == 0), mlp_dim)
    tf = block_f

    b1r = b1.reshape(1, mlp_dim)
    b2r = b2.reshape(1, hidden)

    grid = (rows_p // tm, mlp_dim // tf)

    # Advisory cost estimate for XLA scheduling around the custom call.
    cost = pl.CostEstimate(
        flops=4 * rows_p * hidden * mlp_dim,          # two matmuls
        transcendentals=rows_p * mlp_dim,             # exp inside erf
        bytes_accessed=4 * (2 * rows_p * hidden + 2 * hidden * mlp_dim
                            + mlp_dim + hidden),
    )

    # VMEM: double-buffered inputs + resident output + f32 accumulator.
    blk_bytes = 4 * (tm * hidden + hidden * tf + tf + tf * hidden + hidden
                     + 2 * tm * hidden)
    vmem_limit = int(min(100 * 1024 * 1024, max(8 * 1024 * 1024, 4 * blk_bytes)))

    out = pl.pallas_call(
        _mlp_kernel,
        out_shape=jax.ShapeDtypeStruct((rows_p, hidden), x.dtype),
        grid_spec=pltpu.PrefetchScalarGridSpec(
            num_scalar_prefetch=0,
            grid=grid,
            in_specs=[
                pl.BlockSpec((tm, hidden), lambda i, k: (i, 0)),   # x row tile
                pl.BlockSpec((hidden, tf), lambda i, k: (0, k)),   # w1 slice
                pl.BlockSpec((1, tf), lambda i, k: (0, k)),        # b1 slice
                pl.BlockSpec((tf, hidden), lambda i, k: (k, 0)),   # w2 slice
                pl.BlockSpec((1, hidden), lambda i, k: (0, 0)),    # b2
            ],
            out_specs=pl.BlockSpec((tm, hidden), lambda i, k: (i, 0)),
            scratch_shapes=[pltpu.VMEM((tm, hidden), jnp.float32)],
        ),
        compiler_params=pltpu.CompilerParams(
            dimension_semantics=("parallel", "arbitrary"),
            vmem_limit_bytes=vmem_limit,
        ),
        cost_estimate=cost,
        interpret=interpret,
    )(x2, w1, b1r, w2, b2r)

    return out[:rows].reshape(orig_shape)


# ---------------- pure-JAX reference (for correctness check) ----------------
def _ref_mlp(x, w1, b1, w2, b2):
    h = jnp.matmul(x, w1) + b1
    h = jax.nn.gelu(h, approximate=False)   # torch F.gelu default (exact erf)
    return jnp.matmul(h, w2) + b2           # dropout = identity (eval)


if __name__ == "__main__":
    # Small ViT-like shapes: batch=2, seq=64, hidden=128, mlp_dim=512.
    B, S, HIDDEN, MLP_DIM = 2, 64, 128, 512

    key = jax.random.PRNGKey(0)
    kx, kw1, kb1, kw2, kb2 = jax.random.split(key, 5)

    x = jax.random.normal(kx, (B, S, HIDDEN), jnp.float32)
    # Xavier-ish weights (PyTorch (out,in) already transposed to (in,out)),
    # biases ~ N(0, 1e-6) like the module's _init_weights.
    w1 = jax.random.normal(kw1, (HIDDEN, MLP_DIM), jnp.float32) / jnp.sqrt(HIDDEN)
    b1 = 1e-6 * jax.random.normal(kb1, (MLP_DIM,), jnp.float32)
    w2 = jax.random.normal(kw2, (MLP_DIM, HIDDEN), jnp.float32) / jnp.sqrt(MLP_DIM)
    b2 = 1e-6 * jax.random.normal(kb2, (HIDDEN,), jnp.float32)

    out = jax.block_until_ready(mlp(x, w1, b1, w2, b2))
    ref = jax.block_until_ready(_ref_mlp(x, w1, b1, w2, b2))

    assert out.shape == (B, S, HIDDEN), out.shape
    err = float(jnp.max(jnp.abs(out - ref)))
    assert jnp.allclose(out, ref, atol=1e-4, rtol=1e-4), err
    print("KERNEL_OK")
</pallas_src>

<mosaic_0001>
module attributes {stable_mosaic.version = 11 : i64} {
  func.func @_mlp_kernel(%arg0: i32, %arg1: i32, %arg2: memref<128x128xf32, #tpu.memory_space<vmem>>, %arg3: memref<128x512xf32, #tpu.memory_space<vmem>>, %arg4: memref<1x512xf32, #tpu.memory_space<vmem>>, %arg5: memref<512x128xf32, #tpu.memory_space<vmem>>, %arg6: memref<1x128xf32, #tpu.memory_space<vmem>>, %arg7: memref<128x128xf32, #tpu.memory_space<vmem>>, %arg8: memref<128x128xf32, #tpu.memory_space<vmem>>) attributes {dimension_semantics = [#tpu.dimension_semantics<parallel>, #tpu.dimension_semantics<arbitrary>], iteration_bounds = array<i64: 1, 1>, scalar_prefetch = 0 : i64, scratch_operands = 1 : i64, tpu.core_type = #tpu.core_type<tc>, window_params = [{transform_indices = @transform_0, window_bounds = array<i64: 128, 128>}, {transform_indices = @transform_1, window_bounds = array<i64: 128, 512>}, {transform_indices = @transform_2, window_bounds = array<i64: 1, 512>}, {transform_indices = @transform_3, window_bounds = array<i64: 512, 128>}, {pipeline_mode = #tpu.pipeline_mode<synchronous>, transform_indices = @transform_4, window_bounds = array<i64: 1, 128>}, {transform_indices = @transform_5, window_bounds = array<i64: 128, 128>}]} {
    %c0_i32 = arith.constant 0 : i32
    %0 = arith.cmpi eq, %arg1, %c0_i32 : i32
    %1 = arith.extui %0 : i1 to i32
    %c0_i32_0 = arith.constant 0 : i32
    %2 = arith.cmpi ne, %1, %c0_i32_0 : i32
    scf.if %2 {
      %cst_30 = arith.constant 0.000000e+00 : f32
      %57 = vector.broadcast %cst_30 : f32 to vector<128x128xf32>
      %c0_31 = arith.constant 0 : index
      %c0_32 = arith.constant 0 : index
      %58 = vector.load %arg8[%c0_31, %c0_32] : memref<128x128xf32, #tpu.memory_space<vmem>>, vector<128x128xf32>
      tpu.vector_store %arg8[%c0_31, %c0_32], %57 {strides = array<i32>} : memref<128x128xf32, #tpu.memory_space<vmem>>, vector<128x128xf32>,
    } else {
    }
    %c0 = arith.constant 0 : index
    %c0_1 = arith.constant 0 : index
    %3 = vector.load %arg2[%c0, %c0_1] : memref<128x128xf32, #tpu.memory_space<vmem>>, vector<128x128xf32>
    %c0_2 = arith.constant 0 : index
    %c0_3 = arith.constant 0 : index
    %4 = vector.load %arg3[%c0_2, %c0_3] : memref<128x512xf32, #tpu.memory_space<vmem>>, vector<128x512xf32>
    %cst = arith.constant dense<0.000000e+00> : vector<128x512xf32>
    %5 = tpu.matmul %3, %4, %cst {dimension_numbers = #tpu.dot_dimension_numbers<[1], [0], [0], [1], [0, 0, 1, 1], [], []>} : vector<128x128xf32>, vector<128x512xf32>, vector<128x512xf32> -> vector<128x512xf32>
    %c0_4 = arith.constant 0 : index
    %c0_5 = arith.constant 0 : index
    %6 = vector.load %arg4[%c0_4, %c0_5] : memref<1x512xf32, #tpu.memory_space<vmem>>, vector<1x512xf32>
    %7 = vector.broadcast %6 : vector<1x512xf32> to vector<128x512xf32>
    %8 = arith.addf %5, %7 : vector<128x512xf32>
    %cst_6 = arith.constant 5.000000e-01 : f32
    %9 = vector.broadcast %cst_6 : f32 to vector<128x512xf32>
    %10 = arith.mulf %9, %8 : vector<128x512xf32>
    %cst_7 = arith.constant 0.707106769 : f32
    %11 = vector.broadcast %cst_7 : f32 to vector<128x512xf32>
    %12 = arith.mulf %8, %11 : vector<128x512xf32>
    %13 = math.absf %12 : vector<128x512xf32>
    %cst_8 = arith.constant 0.327591091 : f32
    %14 = vector.broadcast %cst_8 : f32 to vector<128x512xf32>
    %15 = arith.mulf %14, %13 : vector<128x512xf32>
    %cst_9 = arith.constant 1.000000e+00 : f32
    %16 = vector.broadcast %cst_9 : f32 to vector<128x512xf32>
    %17 = arith.addf %16, %15 : vector<128x512xf32>
    %cst_10 = arith.constant 1.000000e+00 : f32
    %18 = vector.broadcast %cst_10 : f32 to vector<128x512xf32>
    %19 = arith.divf %18, %17 : vector<128x512xf32>
    %cst_11 = arith.constant 1.06140542 : f32
    %20 = vector.broadcast %cst_11 : f32 to vector<128x512xf32>
    %21 = arith.mulf %19, %20 : vector<128x512xf32>
    %cst_12 = arith.constant -1.45315206 : f32
    %22 = vector.broadcast %cst_12 : f32 to vector<128x512xf32>
    %23 = arith.addf %22, %21 : vector<128x512xf32>
    %24 = arith.mulf %19, %23 : vector<128x512xf32>
    %cst_13 = arith.constant 1.42141378 : f32
    %25 = vector.broadcast %cst_13 : f32 to vector<128x512xf32>
    %26 = arith.addf %25, %24 : vector<128x512xf32>
    %27 = arith.mulf %19, %26 : vector<128x512xf32>
    %cst_14 = arith.constant -0.284496725 : f32
    %28 = vector.broadcast %cst_14 : f32 to vector<128x512xf32>
    %29 = arith.addf %28, %27 : vector<128x512xf32>
    %30 = arith.mulf %19, %29 : vector<128x512xf32>
    %cst_15 = arith.constant 0.254829586 : f32
    %31 = vector.broadcast %cst_15 : f32 to vector<128x512xf32>
    %32 = arith.addf %31, %30 : vector<128x512xf32>
    %33 = arith.mulf %19, %32 : vector<128x512xf32>
    %cst_16 = arith.constant 0.000000e+00 : f32
    %34 = vector.broadcast %cst_16 : f32 to vector<128x512xf32>
    %35 = arith.subf %34, %13 : vector<128x512xf32>
    %36 = arith.mulf %35, %13 : vector<128x512xf32>
    %37 = math.exp %36 : vector<128x512xf32>
    %38 = arith.mulf %33, %37 : vector<128x512xf32>
    %cst_17 = arith.constant 1.000000e+00 : f32
    %39 = vector.broadcast %cst_17 : f32 to vector<128x512xf32>
    %40 = arith.subf %39, %38 : vector<128x512xf32>
    %cst_18 = arith.constant 0.000000e+00 : f32
    %41 = vector.broadcast %cst_18 : f32 to vector<128x512xf32>
    %42 = arith.cmpf oge, %12, %41 : vector<128x512xf32>
    %cst_19 = arith.constant 0.000000e+00 : f32
    %43 = vector.broadcast %cst_19 : f32 to vector<128x512xf32>
    %44 = arith.subf %43, %40 : vector<128x512xf32>
    %45 = arith.select %42, %40, %44 : vector<128x512xi1>, vector<128x512xf32>
    %cst_20 = arith.constant 1.000000e+00 : f32
    %46 = vector.broadcast %cst_20 : f32 to vector<128x512xf32>
    %47 = arith.addf %46, %45 : vector<128x512xf32>
    %48 = arith.mulf %10, %47 : vector<128x512xf32>
    %c0_21 = arith.constant 0 : index
    %c0_22 = arith.constant 0 : index
    %49 = vector.load %arg8[%c0_21, %c0_22] : memref<128x128xf32, #tpu.memory_space<vmem>>, vector<128x128xf32>
    %c0_23 = arith.constant 0 : index
    %c0_24 = arith.constant 0 : index
    %50 = vector.load %arg5[%c0_23, %c0_24] : memref<512x128xf32, #tpu.memory_space<vmem>>, vector<512x128xf32>
    %cst_25 = arith.constant dense<0.000000e+00> : vector<128x128xf32>
    %51 = tpu.matmul %48, %50, %cst_25 {dimension_numbers = #tpu.dot_dimension_numbers<[1], [0], [0], [1], [0, 0, 1, 1], [], []>} : vector<128x512xf32>, vector<512x128xf32>, vector<128x128xf32> -> vector<128x128xf32>
    %52 = arith.addf %49, %51 : vector<128x128xf32>
    %c0_26 = arith.constant 0 : index
    %c0_27 = arith.constant 0 : index
    %53 = vector.load %arg8[%c0_26, %c0_27] : memref<128x128xf32, #tpu.memory_space<vmem>>, vector<128x128xf32>
    tpu.vector_store %arg8[%c0_26, %c0_27], %52 {strides = array<i32>} : memref<128x128xf32, #tpu.memory_space<vmem>>, vector<128x128xf32>,
    %c0_i32_28 = arith.constant 0 : i32
    %54 = arith.cmpi eq, %arg1, %c0_i32_28 : i32
    %55 = arith.extui %54 : i1 to i32
    %c0_i32_29 = arith.constant 0 : i32
    %56 = arith.cmpi ne, %55, %c0_i32_29 : i32
    scf.if %56 {
      %c0_30 = arith.constant 0 : index
      %c0_31 = arith.constant 0 : index
      %57 = vector.load %arg8[%c0_30, %c0_31] : memref<128x128xf32, #tpu.memory_space<vmem>>, vector<128x128xf32>
      %c0_32 = arith.constant 0 : index
      %c0_33 = arith.constant 0 : index
      %58 = vector.load %arg6[%c0_32, %c0_33] : memref<1x128xf32, #tpu.memory_space<vmem>>, vector<1x128xf32>
      %59 = vector.broadcast %58 : vector<1x128xf32> to vector<128x128xf32>
      %60 = arith.addf %57, %59 : vector<128x128xf32>
      %c0_34 = arith.constant 0 : index
      %c0_35 = arith.constant 0 : index
      %61 = vector.load %arg7[%c0_34, %c0_35] : memref<128x128xf32, #tpu.memory_space<vmem>>, vector<128x128xf32>
      tpu.vector_store %arg7[%c0_34, %c0_35], %60 {strides = array<i32>} : memref<128x128xf32, #tpu.memory_space<vmem>>, vector<128x128xf32>,
    } else {
    }
    return
  }
  func.func @transform_0(%arg0: i32, %arg1: i32) -> (i32, i32) {
    %c0_i32 = arith.constant 0 : i32
    %c0_i32_0 = arith.constant 0 : i32
    return %arg0, %c0_i32 : i32, i32
  }
  func.func @transform_1(%arg0: i32, %arg1: i32) -> (i32, i32) {
    %c0_i32 = arith.constant 0 : i32
    %c0_i32_0 = arith.constant 0 : i32
    return %c0_i32, %arg1 : i32, i32
  }
  func.func @transform_2(%arg0: i32, %arg1: i32) -> (i32, i32) {
    %c0_i32 = arith.constant 0 : i32
    %c0_i32_0 = arith.constant 0 : i32
    return %c0_i32, %arg1 : i32, i32
  }
  func.func @transform_3(%arg0: i32, %arg1: i32) -> (i32, i32) {
    %c0_i32 = arith.constant 0 : i32
    %c0_i32_0 = arith.constant 0 : i32
    return %arg1, %c0_i32 : i32, i32
  }
  func.func @transform_4(%arg0: i32, %arg1: i32) -> (i32, i32) {
    %c0_i32 = arith.constant 0 : i32
    %c0_i32_0 = arith.constant 0 : i32
    %c0_i32_1 = arith.constant 0 : i32
    return %c0_i32, %c0_i32_0 : i32, i32
  }
  func.func @transform_5(%arg0: i32, %arg1: i32) -> (i32, i32) {
    %c0_i32 = arith.constant 0 : i32
    %c0_i32_0 = arith.constant 0 : i32
    return %arg0, %c0_i32 : i32, i32
  }
}

</mosaic_0001>

<llo_original>
// kernel: tpu_custom_call.1
$region0: #{tpu_custom_call.1}
  #allocation0 [shape = 'u32[]', space=smem, size = 0x4, offset = 0x4, fixed_abs, tag = 'smem constant byte address 0x4 - core index']
  #allocation1 [shape = 'u32[144,128]{1,0:T(1,128)}', space=vmem, size = 0x12000, scoped, tag = 'internal scratch']
  #allocation2 [shape = 'f32[128,128]{1,0:T(8,128)}', space=vmem, size = 0x10000, scoped, tag = 'scratch operand']
  %s0 = inlined_call_operand.hbm [shape: f32[128,128], index: 0, kind: input, shape index: {}]
  %s1 = inlined_call_operand.hbm [shape: f32[128,512], index: 1, kind: input, shape index: {}]
  %s2 = inlined_call_operand.hbm [shape: f32[1,512], index: 2, kind: input, shape index: {}]
  %s3 = inlined_call_operand.hbm [shape: f32[512,128], index: 3, kind: input, shape index: {}]
  %s4 = inlined_call_operand.vmem [shape: f32[1,128], index: 4, kind: input, shape index: {}]
  %s5 = inlined_call_operand.hbm [shape: f32[128,128], index: 5, kind: output, shape index: {}]
  %s6 = sld [smem:[#allocation0]]
  $region54: #{tpu_custom_call.1} parent=0
    _
  %s8 = ssub.s32 1, %s6
  %s9 = scalar_select 0, %s8, %s6
  $region1: #{tpu_custom_call.1} parent=0
    #allocation3 [shape = 'u8[65536]{0}', space=vmem, size = 0x10000, scoped, tag = 'input window, operand 0, single buffered']
    #allocation4 [shape = 's32[1]{0}', space=sflag, size = 0x4, scoped, tag = 'scoped memory for tpu_custom_call.1']
    #allocation5 [shape = 's32[1]{0}', space=sflag, size = 0x4, scoped, tag = 'scoped memory for tpu_custom_call.1']
    #allocation6 [shape = 'u8[262144]{0}', space=vmem, size = 0x40000, scoped, tag = 'input window, operand 1, single buffered']
    #allocation7 [shape = 's32[1]{0}', space=sflag, size = 0x4, scoped, tag = 'scoped memory for tpu_custom_call.1']
    #allocation8 [shape = 'u8[2048]{0}', space=vmem, size = 0x800, scoped, tag = 'input window, operand 2, single buffered']
    #allocation9 [shape = 'u8[262144]{0}', space=vmem, size = 0x40000, scoped, tag = 'input window, operand 3, single buffered']
    #allocation10 [shape = 's32[1]{0}', space=sflag, size = 0x4, scoped, tag = 'scoped memory for tpu_custom_call.1']
    #allocation11 [shape = 'u8[65536]{0}', space=vmem, size = 0x10000, scoped, tag = 'output window, operand 0, single buffered']
    %10 = vsyncpa [#allocation4], 0
    %11 = vsyncpa [#allocation7], 0
    %12 = vsyncpa [#allocation10], 0
    %13 = vsyncpa [#allocation5], 0
    // Predicated region
    $region2: #{tpu_custom_call.1} parent=1 // pred_check
      _
    $region3: #{tpu_custom_call.1} parent=1 // pred_check_branch
      %15 = sbr.rel (0) target = $region5
    $region4: #{tpu_custom_call.1} parent=1 // pred_region
      %s17 = ssub.s32 2048, 2048
      %18 = vsyncadd [#allocation4], %s17
      %s19 = sshll.u32 [#allocation3], 4
      %s20 = int_to_ptr.vmem [resolvable:$true] %s19
      %25 = dma.hbm_to_vmem [thread:$0]  %s0, 2048, %s20, [#allocation4], 128, 128, 8
    $region5: #{tpu_custom_call.1} parent=1 // pred_fallthru
      _
    // Predicated region
    $region6: #{tpu_custom_call.1} parent=1 // pred_check
      _
    $region7: #{tpu_custom_call.1} parent=1 // pred_check_branch
      %27 = sbr.rel (0) target = $region9
    $region8: #{tpu_custom_call.1} parent=1 // pred_region
      %s29 = ssub.s32 8192, 8192
      %30 = vsyncadd [#allocation7], %s29
      %s31 = sshll.u32 [#allocation6], 4
      %s32 = int_to_ptr.vmem [resolvable:$true] %s31
      %37 = dma.hbm_to_vmem [thread:$0]  %s1, 8192, %s32, [#allocation7], 512, 512, 32
    $region9: #{tpu_custom_call.1} parent=1 // pred_fallthru
      _
    // Predicated region
    $region10: #{tpu_custom_call.1} parent=1 // pred_check
      _
    $region11: #{tpu_custom_call.1} parent=1 // pred_check_branch
      %39 = sbr.rel (0) target = $region13
    $region12: #{tpu_custom_call.1} parent=1 // pred_region
      %s41 = ssub.s32 64, 64
      %42 = vsyncadd [#allocation7], %s41
      %s44 = sshll.u32 [#allocation8], 4
      %s45 = int_to_ptr.vmem [resolvable:$true] %s44
      %47 = dma.hbm_to_vmem [thread:$0]  %s2, 64, %s45, [#allocation7]
    $region13: #{tpu_custom_call.1} parent=1 // pred_fallthru
      _
    // Predicated region
    $region14: #{tpu_custom_call.1} parent=1 // pred_check
      _
    $region15: #{tpu_custom_call.1} parent=1 // pred_check_branch
      %49 = sbr.rel (0) target = $region17
    $region16: #{tpu_custom_call.1} parent=1 // pred_region
      %s51 = ssub.s32 8192, 8192
      %52 = vsyncadd [#allocation10], %s51
      %s53 = sshll.u32 [#allocation9], 4
      %s54 = int_to_ptr.vmem [resolvable:$true] %s53
      %59 = dma.hbm_to_vmem [thread:$0]  %s3, 8192, %s54, [#allocation10], 128, 128, 8
    $region17: #{tpu_custom_call.1} parent=1 // pred_fallthru
      _
    // Predicated region
    $region18: #{tpu_custom_call.1} parent=1 // pred_check
      _
    $region19: #{tpu_custom_call.1} parent=1 // pred_check_branch
      %61 = sbr.rel (0) target = $region21
    $region20: #{tpu_custom_call.1} parent=1 // pred_region
      _
    $region21: #{tpu_custom_call.1} parent=1 // pred_fallthru
      _
    // Predicated region
    $region22: #{tpu_custom_call.1} parent=1 // pred_check
      _
    $region23: #{tpu_custom_call.1} parent=1 // pred_check_branch
      %63 = sbr.rel (0) target = $region25
    $region24: #{tpu_custom_call.1} parent=1 // pred_region
      %64 = dma.done [#allocation4], 2048
    $region25: #{tpu_custom_call.1} parent=1 // pred_fallthru
      _
    // Predicated region
    $region26: #{tpu_custom_call.1} parent=1 // pred_check
      _
    $region27: #{tpu_custom_call.1} parent=1 // pred_check_branch
      %66 = sbr.rel (0) target = $region29
    $region28: #{tpu_custom_call.1} parent=1 // pred_region
      %67 = dma.done [#allocation7], 8192
    $region29: #{tpu_custom_call.1} parent=1 // pred_fallthru
      _
    // Predicated region
    $region30: #{tpu_custom_call.1} parent=1 // pred_check
      _
    $region31: #{tpu_custom_call.1} parent=1 // pred_check_branch
      %69 = sbr.rel (0) target = $region33
    $region32: #{tpu_custom_call.1} parent=1 // pred_region
      %70 = dma.done [#allocation7], 64
    $region33: #{tpu_custom_call.1} parent=1 // pred_fallthru
      _
    // Predicated region
    $region34: #{tpu_custom_call.1} parent=1 // pred_check
      _
    $region35: #{tpu_custom_call.1} parent=1 // pred_check_branch
      %72 = sbr.rel (0) target = $region37
    $region36: #{tpu_custom_call.1} parent=1 // pred_region
      %73 = dma.done [#allocation10], 8192
    $region37: #{tpu_custom_call.1} parent=1 // pred_fallthru
      _
    %p74 = scmp.eq.s32.totalorder 0, 0
    // Predicated region
    $region38: #{tpu_custom_call.1} parent=1 // pred_check
      %p75 = pneg %p74
    $region39: #{tpu_custom_call.1} parent=1 // pred_check_branch
      %77 = sbr.rel (%p75) target = $region41
    $region40: #{tpu_custom_call.1} parent=1 // pred_region
      %78 = vst [vmem:[#allocation2] sm:$0xff] 0.0
      %79 = vst [vmem:[#allocation2 + $0x8] sm:$0xff] 0.0
      %80 = vst [vmem:[#allocation2 + $0x10] sm:$0xff] 0.0
      %81 = vst [vmem:[#allocation2 + $0x18] sm:$0xff] 0.0
      %82 = vst [vmem:[#allocation2 + $0x20] sm:$0xff] 0.0
      %83 = vst [vmem:[#allocation2 + $0x28] sm:$0xff] 0.0
      %84 = vst [vmem:[#allocation2 + $0x30] sm:$0xff] 0.0
      %85 = vst [vmem:[#allocation2 + $0x38] sm:$0xff] 0.0
      %86 = vst [vmem:[#allocation2 + $0x40] sm:$0xff] 0.0
      %87 = vst [vmem:[#allocation2 + $0x48] sm:$0xff] 0.0
      %88 = vst [vmem:[#allocation2 + $0x50] sm:$0xff] 0.0
      %89 = vst [vmem:[#allocation2 + $0x58] sm:$0xff] 0.0
      %90 = vst [vmem:[#allocation2 + $0x60] sm:$0xff] 0.0
      %91 = vst [vmem:[#allocation2 + $0x68] sm:$0xff] 0.0
      %92 = vst [vmem:[#allocation2 + $0x70] sm:$0xff] 0.0
      %93 = vst [vmem:[#allocation2 + $0x78] sm:$0xff] 0.0
    $region41: #{tpu_custom_call.1} parent=1 // pred_fallthru
      _
    %v94 = vld [vmem:[#allocation3] sm:$0xff]
    %v95 = vld [vmem:[#allocation3 + $0x8] sm:$0xff]
    %v96 = vld [vmem:[#allocation3 + $0x10] sm:$0xff]
    %v97 = vld [vmem:[#allocation3 + $0x18] sm:$0xff]
    %v98 = vld [vmem:[#allocation3 + $0x20] sm:$0xff]
    %v99 = vld [vmem:[#allocation3 + $0x28] sm:$0xff]
    %v100 = vld [vmem:[#allocation3 + $0x30] sm:$0xff]
    %v101 = vld [vmem:[#allocation3 + $0x38] sm:$0xff]
    %v102 = vld [vmem:[#allocation3 + $0x40] sm:$0xff]
    %v103 = vld [vmem:[#allocation3 + $0x48] sm:$0xff]
    %v104 = vld [vmem:[#allocation3 + $0x50] sm:$0xff]
    %v105 = vld [vmem:[#allocation3 + $0x58] sm:$0xff]
    %v106 = vld [vmem:[#allocation3 + $0x60] sm:$0xff]
    %v107 = vld [vmem:[#allocation3 + $0x68] sm:$0xff]
    %v108 = vld [vmem:[#allocation3 + $0x70] sm:$0xff]
    %v109 = vld [vmem:[#allocation3 + $0x78] sm:$0xff]
    %v110 = vld [vmem:[#allocation6] sm:$0xff]
    %v111 = vld [vmem:[#allocation6 + $0x8] sm:$0xff]
    %v112 = vld [vmem:[#allocation6 + $0x10] sm:$0xff]
    %v113 = vld [vmem:[#allocation6 + $0x18] sm:$0xff]
    %v114 = vld [vmem:[#allocation6 + $0x20] sm:$0xff]
    %v115 = vld [vmem:[#allocation6 + $0x28] sm:$0xff]
    %v116 = vld [vmem:[#allocation6 + $0x30] sm:$0xff]
    %v117 = vld [vmem:[#allocation6 + $0x38] sm:$0xff]
    %v118 = vld [vmem:[#allocation6 + $0x40] sm:$0xff]
    %v119 = vld [vmem:[#allocation6 + $0x48] sm:$0xff]
    %v120 = vld [vmem:[#allocation6 + $0x50] sm:$0xff]
    %v121 = vld [vmem:[#allocation6 + $0x58] sm:$0xff]
    %v122 = vld [vmem:[#allocation6 + $0x60] sm:$0xff]
    %v123 = vld [vmem:[#allocation6 + $0x68] sm:$0xff]
    %v124 = vld [vmem:[#allocation6 + $0x70] sm:$0xff]
    %v125 = vld [vmem:[#allocation6 + $0x78] sm:$0xff]
    %v126 = vld [vmem:[#allocation6 + $0x80] sm:$0xff]
    %v127 = vld [vmem:[#allocation6 + $0x88] sm:$0xff]
    %v128 = vld [vmem:[#allocation6 + $0x90] sm:$0xff]
    %v129 = vld [vmem:[#allocation6 + $0x98] sm:$0xff]
    %v130 = vld [vmem:[#allocation6 + $0xa0] sm:$0xff]
    %v131 = vld [vmem:[#allocation6 + $0xa8] sm:$0xff]
    %v132 = vld [vmem:[#allocation6 + $0xb0] sm:$0xff]
    %v133 = vld [vmem:[#allocation6 + $0xb8] sm:$0xff]
    %v134 = vld [vmem:[#allocation6 + $0xc0] sm:$0xff]
    %v135 = vld [vmem:[#allocation6 + $0xc8] sm:$0xff]
    %v136 = vld [vmem:[#allocation6 + $0xd0] sm:$0xff]
    %v137 = vld [vmem:[#allocation6 + $0xd8] sm:$0xff]
    %v138 = vld [vmem:[#allocation6 + $0xe0] sm:$0xff]
    %v139 = vld [vmem:[#allocation6 + $0xe8] sm:$0xff]
    %v140 = vld [vmem:[#allocation6 + $0xf0] sm:$0xff]
    %v141 = vld [vmem:[#allocation6 + $0xf8] sm:$0xff]
    %v142 = vld [vmem:[#allocation6 + $0x100] sm:$0xff]
    %v143 = vld [vmem:[#allocation6 + $0x108] sm:$0xff]
    %v144 = vld [vmem:[#allocation6 + $0x110] sm:$0xff]
    %v145 = vld [vmem:[#allocation6 + $0x118] sm:$0xff]
    %v146 = vld [vmem:[#allocation6 + $0x120] sm:$0xff]
    %v147 = vld [vmem:[#allocation6 + $0x128] sm:$0xff]
    %v148 = vld [vmem:[#allocation6 + $0x130] sm:$0xff]
    %v149 = vld [vmem:[#allocation6 + $0x138] sm:$0xff]
    %v150 = vld [vmem:[#allocation6 + $0x140] sm:$0xff]
    %v151 = vld [vmem:[#allocation6 + $0x148] sm:$0xff]
    %v152 = vld [vmem:[#allocation6 + $0x150] sm:$0xff]
    %v153 = vld [vmem:[#allocation6 + $0x158] sm:$0xff]
    %v154 = vld [vmem:[#allocation6 + $0x160] sm:$0xff]
    %v155 = vld [vmem:[#allocation6 + $0x168] sm:$0xff]
    %v156 = vld [vmem:[#allocation6 + $0x170] sm:$0xff]
    %v157 = vld [vmem:[#allocation6 + $0x178] sm:$0xff]
    %v158 = vld [vmem:[#allocation6 + $0x180] sm:$0xff]
    %v159 = vld [vmem:[#allocation6 + $0x188] sm:$0xff]
    %v160 = vld [vmem:[#allocation6 + $0x190] sm:$0xff]
    %v161 = vld [vmem:[#allocation6 + $0x198] sm:$0xff]
    %v162 = vld [vmem:[#allocation6 + $0x1a0] sm:$0xff]
    %v163 = vld [vmem:[#allocation6 + $0x1a8] sm:$0xff]
    %v164 = vld [vmem:[#allocation6 + $0x1b0] sm:$0xff]
    %v165 = vld [vmem:[#allocation6 + $0x1b8] sm:$0xff]
    %v166 = vld [vmem:[#allocation6 + $0x1c0] sm:$0xff]
    %v167 = vld [vmem:[#allocation6 + $0x1c8] sm:$0xff]
    %v168 = vld [vmem:[#allocation6 + $0x1d0] sm:$0xff]
    %v169 = vld [vmem:[#allocation6 + $0x1d8] sm:$0xff]
    %v170 = vld [vmem:[#allocation6 + $0x1e0] sm:$0xff]
    %v171 = vld [vmem:[#allocation6 + $0x1e8] sm:$0xff]
    %v172 = vld [vmem:[#allocation6 + $0x1f0] sm:$0xff]
    %v173 = vld [vmem:[#allocation6 + $0x1f8] sm:$0xff]
    %v174 = vld [vmem:[#allocation8] sm:$0xf]
    %v176 = vlaneseq
    %v177 = vshrl.u32 %v176, 7
    %v178 = vsub.s32 0, %v177
    %v179 = vrot.slane %v174, %v178
    %v180 = vlaneseq
    %v181 = vshrl.u32 %v180, 7
    %v182 = vsub.s32 1, %v181
    %v183 = vrot.slane %v174, %v182
    %v184 = vlaneseq
    %v185 = vshrl.u32 %v184, 7
    %v186 = vsub.s32 2, %v185
    %v187 = vrot.slane %v174, %v186
    %v188 = vlaneseq
    %v189 = vshrl.u32 %v188, 7
    %v190 = vsub.s32 3, %v189
    %v191 = vrot.slane %v174, %v190
    %196 = vmatprep.subr.mxu0 %v171
    %197 = vmatpush1.msra.mxu0 %v170
    %198 = vmatprep.subr.mxu0 %v167
    %199 = vmatpush1.msra.mxu0 %v166
    %200 = vmatprep.subr.mxu0 %v163
    %201 = vmatpush1.msra.mxu0 %v162
    %202 = vmatprep.subr.mxu0 %v159
    %203 = vmatpush1.msra.mxu0 %v158
    %204 = vmatprep.subr.mxu0 %v155
    %205 = vmatpush1.msra.mxu0 %v154
    %206 = vmatprep.subr.mxu0 %v151
    %207 = vmatpush1.msra.mxu0 %v150
    %208 = vmatprep.subr.mxu0 %v147
    %209 = vmatpush1.msra.mxu0 %v146
    %210 = vmatprep.subr.mxu0 %v143
    %211 = vmatpush1.msra.mxu0 %v142
    %212 = vmatprep.subr.mxu0 %v139
    %213 = vmatpush1.msra.mxu0 %v138
    %214 = vmatprep.subr.mxu0 %v135
    %215 = vmatpush1.msra.mxu0 %v134
    %216 = vmatprep.subr.mxu0 %v131
    %217 = vmatpush1.msra.mxu0 %v130
    %218 = vmatprep.subr.mxu0 %v127
    %219 = vmatpush1.msra.mxu0 %v126
    %220 = vmatprep.subr.mxu0 %v123
    %221 = vmatpush1.msra.mxu0 %v122
    %222 = vmatprep.subr.mxu0 %v119
    %223 = vmatpush1.msra.mxu0 %v118
    %224 = vmatprep.subr.mxu0 %v115
    %225 = vmatpush1.msra.mxu0 %v114
    %226 = vmatprep.subr.mxu0 %v111
    %227 = vmatpush1.msra.mxu0 %v110
    %228 = vmatprep.subr.mxu0 0.0
    %229 = vmatpush2.msra.mxu0 0.0
    %230 = vmatprep.subr.mxu0 0.0
    %231 = vmatpush2.msra.mxu0 0.0
    %232 = vmatprep.subr.mxu0 0.0
    %233 = vmatpush2.msra.mxu0 0.0
    %234 = vmatprep.subr.mxu0 0.0
    %235 = vmatpush2.msra.mxu0 0.0
    %236 = vmatprep.subr.mxu0 0.0
    %237 = vmatpush2.msra.mxu0 0.0
    %238 = vmatprep.subr.mxu0 0.0
    %239 = vmatpush2.msra.mxu0 0.0
    %240 = vmatprep.subr.mxu0 0.0
    %241 = vmatpush2.msra.mxu0 0.0
    %242 = vmatprep.subr.mxu0 0.0
    %243 = vmatpush2.msra.mxu0 0.0
    %244 = vmatprep.subr.mxu0 0.0
    %245 = vmatpush2.msra.mxu0 0.0
    %246 = vmatprep.subr.mxu0 0.0
    %247 = vmatpush2.msra.mxu0 0.0
    %248 = vmatprep.subr.mxu0 0.0
    %249 = vmatpush2.msra.mxu0 0.0
    %250 = vmatprep.subr.mxu0 0.0
    %251 = vmatpush2.msra.mxu0 0.0
    %252 = vmatprep.subr.mxu0 0.0
    %253 = vmatpush2.msra.mxu0 0.0
    %254 = vmatprep.subr.mxu0 0.0
    %255 = vmatpush2.msra.mxu0 0.0
    %256 = vmatprep.subr.mxu0 0.0
    %257 = vmatpush2.msra.mxu0 0.0
    %258 = vmatprep.subr.mxu0 0.0
    %259 = vmatpush2.msra.mxu0 0.0
    %260 = vmatprep.mubr.f32.mxu0 0.0
    %261 = vmatmul.mubr.f32.gmra.mxu0 %v94
    %v262 = vpop.f32.mrf.mxu0
    %v263 = vadd.f32 %v179, %v262
    %v264 = vpop.f32.mrf.mxu0
    %v265 = vadd.f32 %v183, %v264
    %266 = vmatprep.mubr.f32.mxu0 0.0
    %267 = vmatmul.mubr.f32.gmra.mxu0 %v95
    %v268 = vpop.f32.mrf.mxu0
    %v269 = vadd.f32 %v179, %v268
    %v270 = vpop.f32.mrf.mxu0
    %v271 = vadd.f32 %v183, %v270
    %272 = vmatprep.mubr.f32.mxu0 0.0
    %273 = vmatmul.mubr.f32.gmra.mxu0 %v96
    %v274 = vpop.f32.mrf.mxu0
    %v275 = vadd.f32 %v179, %v274
    %v276 = vpop.f32.mrf.mxu0
    %v277 = vadd.f32 %v183, %v276
    %278 = vmatprep.mubr.f32.mxu0 0.0
    %279 = vmatmul.mubr.f32.gmra.mxu0 %v97
    %v280 = vpop.f32.mrf.mxu0
    %v281 = vadd.f32 %v179, %v280
    %v282 = vpop.f32.mrf.mxu0
    %v283 = vadd.f32 %v183, %v282
    %284 = vmatprep.mubr.f32.mxu0 0.0
    %285 = vmatmul.mubr.f32.gmra.mxu0 %v98
    %v286 = vpop.f32.mrf.mxu0
    %v287 = vadd.f32 %v179, %v286
    %v288 = vpop.f32.mrf.mxu0
    %v289 = vadd.f32 %v183, %v288
    %290 = vmatprep.mubr.f32.mxu0 0.0
    %291 = vmatmul.mubr.f32.gmra.mxu0 %v99
    %v292 = vpop.f32.mrf.mxu0
    %v293 = vadd.f32 %v179, %v292
    %v294 = vpop.f32.mrf.mxu0
    %v295 = vadd.f32 %v183, %v294
    %296 = vmatprep.mubr.f32.mxu0 0.0
    %297 = vmatmul.mubr.f32.gmra.mxu0 %v100
    %v298 = vpop.f32.mrf.mxu0
    %v299 = vadd.f32 %v179, %v298
    %v300 = vpop.f32.mrf.mxu0
    %v301 = vadd.f32 %v183, %v300
    %302 = vmatprep.mubr.f32.mxu0 0.0
    %303 = vmatmul.mubr.f32.gmra.mxu0 %v101
    %v304 = vpop.f32.mrf.mxu0
    %v305 = vadd.f32 %v179, %v304
    %v306 = vpop.f32.mrf.mxu0
    %v307 = vadd.f32 %v183, %v306
    %308 = vmatprep.mubr.f32.mxu0 0.0
    %309 = vmatmul.mubr.f32.gmra.mxu0 %v102
    %v310 = vpop.f32.mrf.mxu0
    %v311 = vadd.f32 %v179, %v310
    %v312 = vpop.f32.mrf.mxu0
    %v313 = vadd.f32 %v183, %v312
    %314 = vmatprep.mubr.f32.mxu0 0.0
    %315 = vmatmul.mubr.f32.gmra.mxu0 %v103
    %v316 = vpop.f32.mrf.mxu0
    %v317 = vadd.f32 %v179, %v316
    %v318 = vpop.f32.mrf.mxu0
    %v319 = vadd.f32 %v183, %v318
    %320 = vmatprep.mubr.f32.mxu0 0.0
    %321 = vmatmul.mubr.f32.gmra.mxu0 %v104
    %v322 = vpop.f32.mrf.mxu0
    %v323 = vadd.f32 %v179, %v322
    %v324 = vpop.f32.mrf.mxu0
    %v325 = vadd.f32 %v183, %v324
    %326 = vmatprep.mubr.f32.mxu0 0.0
    %327 = vmatmul.mubr.f32.gmra.mxu0 %v105
    %v328 = vpop.f32.mrf.mxu0
    %v329 = vadd.f32 %v179, %v328
    %v330 = vpop.f32.mrf.mxu0
    %v331 = vadd.f32 %v183, %v330
    %332 = vmatprep.mubr.f32.mxu0 0.0
    %333 = vmatmul.mubr.f32.gmra.mxu0 %v106
    %v334 = vpop.f32.mrf.mxu0
    %v335 = vadd.f32 %v179, %v334
    %v336 = vpop.f32.mrf.mxu0
    %v337 = vadd.f32 %v183, %v336
    %338 = vmatprep.mubr.f32.mxu0 0.0
    %339 = vmatmul.mubr.f32.gmra.mxu0 %v107
    %v340 = vpop.f32.mrf.mxu0
    %v341 = vadd.f32 %v179, %v340
    %v342 = vpop.f32.mrf.mxu0
    %v343 = vadd.f32 %v183, %v342
    %344 = vmatprep.mubr.f32.mxu0 0.0
    %345 = vmatmul.mubr.f32.gmra.mxu0 %v108
    %v346 = vpop.f32.mrf.mxu0
    %v347 = vadd.f32 %v179, %v346
    %v348 = vpop.f32.mrf.mxu0
    %v349 = vadd.f32 %v183, %v348
    %350 = vmatprep.mubr.f32.mxu0 0.0
    %351 = vmatmul.mubr.f32.gmra.mxu0 %v109
    %v352 = vpop.f32.mrf.mxu0
    %v353 = vadd.f32 %v179, %v352
    %v354 = vpop.f32.mrf.mxu0
    %v355 = vadd.f32 %v183, %v354
    %356 = vdwg.mxu0
    %357 = vmatprep.subr.mxu0 %v173
    %358 = vmatpush1.msra.mxu0 %v172
    %359 = vmatprep.subr.mxu0 %v169
    %360 = vmatpush1.msra.mxu0 %v168
    %361 = vmatprep.subr.mxu0 %v165
    %362 = vmatpush1.msra.mxu0 %v164
    %363 = vmatprep.subr.mxu0 %v161
    %364 = vmatpush1.msra.mxu0 %v160
    %365 = vmatprep.subr.mxu0 %v157
    %366 = vmatpush1.msra.mxu0 %v156
    %367 = vmatprep.subr.mxu0 %v153
    %368 = vmatpush1.msra.mxu0 %v152
    %369 = vmatprep.subr.mxu0 %v149
    %370 = vmatpush1.msra.mxu0 %v148
    %371 = vmatprep.subr.mxu0 %v145
    %372 = vmatpush1.msra.mxu0 %v144
    %373 = vmatprep.subr.mxu0 %v141
    %374 = vmatpush1.msra.mxu0 %v140
    %375 = vmatprep.subr.mxu0 %v137
    %376 = vmatpush1.msra.mxu0 %v136
    %377 = vmatprep.subr.mxu0 %v133
    %378 = vmatpush1.msra.mxu0 %v132
    %379 = vmatprep.subr.mxu0 %v129
    %380 = vmatpush1.msra.mxu0 %v128
    %381 = vmatprep.subr.mxu0 %v125
    %382 = vmatpush1.msra.mxu0 %v124
    %383 = vmatprep.subr.mxu0 %v121
    %384 = vmatpush1.msra.mxu0 %v120
    %385 = vmatprep.subr.mxu0 %v117
    %386 = vmatpush1.msra.mxu0 %v116
    %387 = vmatprep.subr.mxu0 %v113
    %388 = vmatpush1.msra.mxu0 %v112
    %389 = vmatprep.subr.mxu0 0.0
    %390 = vmatpush2.msra.mxu0 0.0
    %391 = vmatprep.subr.mxu0 0.0
    %392 = vmatpush2.msra.mxu0 0.0
    %393 = vmatprep.subr.mxu0 0.0
    %394 = vmatpush2.msra.mxu0 0.0
    %395 = vmatprep.subr.mxu0 0.0
    %396 = vmatpush2.msra.mxu0 0.0
    %397 = vmatprep.subr.mxu0 0.0
    %398 = vmatpush2.msra.mxu0 0.0
    %399 = vmatprep.subr.mxu0 0.0
    %400 = vmatpush2.msra.mxu0 0.0
    %401 = vmatprep.subr.mxu0 0.0
    %402 = vmatpush2.msra.mxu0 0.0
    %403 = vmatprep.subr.mxu0 0.0
    %404 = vmatpush2.msra.mxu0 0.0
    %405 = vmatprep.subr.mxu0 0.0
    %406 = vmatpush2.msra.mxu0 0.0
    %407 = vmatprep.subr.mxu0 0.0
    %408 = vmatpush2.msra.mxu0 0.0
    %409 = vmatprep.subr.mxu0 0.0
    %410 = vmatpush2.msra.mxu0 0.0
    %411 = vmatprep.subr.mxu0 0.0
    %412 = vmatpush2.msra.mxu0 0.0
    %413 = vmatprep.subr.mxu0 0.0
    %414 = vmatpush2.msra.mxu0 0.0
    %415 = vmatprep.subr.mxu0 0.0
    %416 = vmatpush2.msra.mxu0 0.0
    %417 = vmatprep.subr.mxu0 0.0
    %418 = vmatpush2.msra.mxu0 0.0
    %419 = vmatprep.subr.mxu0 0.0
    %420 = vmatpush2.msra.mxu0 0.0
    %421 = vmatprep.mubr.f32.mxu0 0.0
    %422 = vmatmul.mubr.f32.gmra.mxu0 %v94
    %v423 = vpop.f32.mrf.mxu0
    %v424 = vadd.f32 %v187, %v423
    %v425 = vpop.f32.mrf.mxu0
    %v426 = vadd.f32 %v191, %v425
    %427 = vmatprep.mubr.f32.mxu0 0.0
    %428 = vmatmul.mubr.f32.gmra.mxu0 %v95
    %v429 = vpop.f32.mrf.mxu0
    %v430 = vadd.f32 %v187, %v429
    %v431 = vpop.f32.mrf.mxu0
    %v432 = vadd.f32 %v191, %v431
    %433 = vmatprep.mubr.f32.mxu0 0.0
    %434 = vmatmul.mubr.f32.gmra.mxu0 %v96
    %v435 = vpop.f32.mrf.mxu0
    %v436 = vadd.f32 %v187, %v435
    %v437 = vpop.f32.mrf.mxu0
    %v438 = vadd.f32 %v191, %v437
    %439 = vmatprep.mubr.f32.mxu0 0.0
    %440 = vmatmul.mubr.f32.gmra.mxu0 %v97
    %v441 = vpop.f32.mrf.mxu0
    %v442 = vadd.f32 %v187, %v441
    %v443 = vpop.f32.mrf.mxu0
    %v444 = vadd.f32 %v191, %v443
    %445 = vmatprep.mubr.f32.mxu0 0.0
    %446 = vmatmul.mubr.f32.gmra.mxu0 %v98
    %v447 = vpop.f32.mrf.mxu0
    %v448 = vadd.f32 %v187, %v447
    %v449 = vpop.f32.mrf.mxu0
    %v450 = vadd.f32 %v191, %v449
    %451 = vmatprep.mubr.f32.mxu0 0.0
    %452 = vmatmul.mubr.f32.gmra.mxu0 %v99
    %v453 = vpop.f32.mrf.mxu0
    %v454 = vadd.f32 %v187, %v453
    %v455 = vpop.f32.mrf.mxu0
    %v456 = vadd.f32 %v191, %v455
    %457 = vmatprep.mubr.f32.mxu0 0.0
    %458 = vmatmul.mubr.f32.gmra.mxu0 %v100
    %v459 = vpop.f32.mrf.mxu0
    %v460 = vadd.f32 %v187, %v459
    %v461 = vpop.f32.mrf.mxu0
    %v462 = vadd.f32 %v191, %v461
    %463 = vmatprep.mubr.f32.mxu0 0.0
    %464 = vmatmul.mubr.f32.gmra.mxu0 %v101
    %v465 = vpop.f32.mrf.mxu0
    %v466 = vadd.f32 %v187, %v465
    %v467 = vpop.f32.mrf.mxu0
    %v468 = vadd.f32 %v191, %v467
    %469 = vmatprep.mubr.f32.mxu0 0.0
    %470 = vmatmul.mubr.f32.gmra.mxu0 %v102
    %v471 = vpop.f32.mrf.mxu0
    %v472 = vadd.f32 %v187, %v471
    %v473 = vpop.f32.mrf.mxu0
    %v474 = vadd.f32 %v191, %v473
    %475 = vmatprep.mubr.f32.mxu0 0.0
    %476 = vmatmul.mubr.f32.gmra.mxu0 %v103
    %v477 = vpop.f32.mrf.mxu0
    %v478 = vadd.f32 %v187, %v477
    %v479 = vpop.f32.mrf.mxu0
    %v480 = vadd.f32 %v191, %v479
    %481 = vmatprep.mubr.f32.mxu0 0.0
    %482 = vmatmul.mubr.f32.gmra.mxu0 %v104
    %v483 = vpop.f32.mrf.mxu0
    %v484 = vadd.f32 %v187, %v483
    %v485 = vpop.f32.mrf.mxu0
    %v486 = vadd.f32 %v191, %v485
    %487 = vmatprep.mubr.f32.mxu0 0.0
    %488 = vmatmul.mubr.f32.gmra.mxu0 %v105
    %v489 = vpop.f32.mrf.mxu0
    %v490 = vadd.f32 %v187, %v489
    %v491 = vpop.f32.mrf.mxu0
    %v492 = vadd.f32 %v191, %v491
    %493 = vmatprep.mubr.f32.mxu0 0.0
    %494 = vmatmul.mubr.f32.gmra.mxu0 %v106
    %v495 = vpop.f32.mrf.mxu0
    %v496 = vadd.f32 %v187, %v495
    %v497 = vpop.f32.mrf.mxu0
    %v498 = vadd.f32 %v191, %v497
    %499 = vmatprep.mubr.f32.mxu0 0.0
    %500 = vmatmul.mubr.f32.gmra.mxu0 %v107
    %v501 = vpop.f32.mrf.mxu0
    %v502 = vadd.f32 %v187, %v501
    %v503 = vpop.f32.mrf.mxu0
    %v504 = vadd.f32 %v191, %v503
    %505 = vmatprep.mubr.f32.mxu0 0.0
    %506 = vmatmul.mubr.f32.gmra.mxu0 %v108
    %v507 = vpop.f32.mrf.mxu0
    %v508 = vadd.f32 %v187, %v507
    %v509 = vpop.f32.mrf.mxu0
    %v510 = vadd.f32 %v191, %v509
    %511 = vmatprep.mubr.f32.mxu0 0.0
    %512 = vmatmul.mubr.f32.gmra.mxu0 %v109
    %v513 = vpop.f32.mrf.mxu0
    %v514 = vadd.f32 %v187, %v513
    %v515 = vpop.f32.mrf.mxu0
    %v516 = vadd.f32 %v191, %v515
    %517 = vdwg.mxu0
    %v518 = vmul.f32 %v263, 0.5
    %v519 = vmul.f32 %v265, 0.5
    %v520 = vmul.f32 %v424, 0.5
    %v521 = vmul.f32 %v426, 0.5
    %v522 = vmul.f32 %v269, 0.5
    %v523 = vmul.f32 %v271, 0.5
    %v524 = vmul.f32 %v430, 0.5
    %v525 = vmul.f32 %v432, 0.5
    %v526 = vmul.f32 %v275, 0.5
    %v527 = vmul.f32 %v277, 0.5
    %v528 = vmul.f32 %v436, 0.5
    %v529 = vmul.f32 %v438, 0.5
    %v530 = vmul.f32 %v281, 0.5
    %v531 = vmul.f32 %v283, 0.5
    %v532 = vmul.f32 %v442, 0.5
    %v533 = vmul.f32 %v444, 0.5
    %v534 = vmul.f32 %v287, 0.5
    %v535 = vmul.f32 %v289, 0.5
    %v536 = vmul.f32 %v448, 0.5
    %v537 = vmul.f32 %v450, 0.5
    %v538 = vmul.f32 %v293, 0.5
    %v539 = vmul.f32 %v295, 0.5
    %v540 = vmul.f32 %v454, 0.5
    %v541 = vmul.f32 %v456, 0.5
    %v542 = vmul.f32 %v299, 0.5
    %v543 = vmul.f32 %v301, 0.5
    %v544 = vmul.f32 %v460, 0.5
    %v545 = vmul.f32 %v462, 0.5
    %v546 = vmul.f32 %v305, 0.5
    %v547 = vmul.f32 %v307, 0.5
    %v548 = vmul.f32 %v466, 0.5
    %v549 = vmul.f32 %v468, 0.5
    %v550 = vmul.f32 %v311, 0.5
    %v551 = vmul.f32 %v313, 0.5
    %v552 = vmul.f32 %v472, 0.5
    %v553 = vmul.f32 %v474, 0.5
    %v554 = vmul.f32 %v317, 0.5
    %v555 = vmul.f32 %v319, 0.5
    %v556 = vmul.f32 %v478, 0.5
    %v557 = vmul.f32 %v480, 0.5
    %v558 = vmul.f32 %v323, 0.5
    %v559 = vmul.f32 %v325, 0.5
    %v560 = vmul.f32 %v484, 0.5
    %v561 = vmul.f32 %v486, 0.5
    %v562 = vmul.f32 %v329, 0.5
    %v563 = vmul.f32 %v331, 0.5
    %v564 = vmul.f32 %v490, 0.5
    %v565 = vmul.f32 %v492, 0.5
    %v566 = vmul.f32 %v335, 0.5
    %v567 = vmul.f32 %v337, 0.5
    %v568 = vmul.f32 %v496, 0.5
    %v569 = vmul.f32 %v498, 0.5
    %v570 = vmul.f32 %v341, 0.5
    %v571 = vmul.f32 %v343, 0.5
    %v572 = vmul.f32 %v502, 0.5
    %v573 = vmul.f32 %v504, 0.5
    %v574 = vmul.f32 %v347, 0.5
    %v575 = vmul.f32 %v349, 0.5
    %v576 = vmul.f32 %v508, 0.5
    %v577 = vmul.f32 %v510, 0.5
    %v578 = vmul.f32 %v353, 0.5
    %v579 = vmul.f32 %v355, 0.5
    %v580 = vmul.f32 %v514, 0.5
    %v581 = vmul.f32 %v516, 0.5
    %v582 = vmul.f32 %v263, 0.70710677
    %v583 = vmul.f32 %v265, 0.70710677
    %v584 = vmul.f32 %v424, 0.70710677
    %v585 = vmul.f32 %v426, 0.70710677
    %v586 = vmul.f32 %v269, 0.70710677
    %v587 = vmul.f32 %v271, 0.70710677
    %v588 = vmul.f32 %v430, 0.70710677
    %v589 = vmul.f32 %v432, 0.70710677
    %v590 = vmul.f32 %v275, 0.70710677
    %v591 = vmul.f32 %v277, 0.70710677
    %v592 = vmul.f32 %v436, 0.70710677
    %v593 = vmul.f32 %v438, 0.70710677
    %v594 = vmul.f32 %v281, 0.70710677
    %v595 = vmul.f32 %v283, 0.70710677
    %v596 = vmul.f32 %v442, 0.70710677
    %v597 = vmul.f32 %v444, 0.70710677
    %v598 = vmul.f32 %v287, 0.70710677
    %v599 = vmul.f32 %v289, 0.70710677
    %v600 = vmul.f32 %v448, 0.70710677
    %v601 = vmul.f32 %v450, 0.70710677
    %v602 = vmul.f32 %v293, 0.70710677
    %v603 = vmul.f32 %v295, 0.70710677
    %v604 = vmul.f32 %v454, 0.70710677
    %v605 = vmul.f32 %v456, 0.70710677
    %v606 = vmul.f32 %v299, 0.70710677
    %v607 = vmul.f32 %v301, 0.70710677
    %v608 = vmul.f32 %v460, 0.70710677
    %v609 = vmul.f32 %v462, 0.70710677
    %v610 = vmul.f32 %v305, 0.70710677
    %v611 = vmul.f32 %v307, 0.70710677
    %v612 = vmul.f32 %v466, 0.70710677
    %v613 = vmul.f32 %v468, 0.70710677
    %v614 = vmul.f32 %v311, 0.70710677
    %v615 = vmul.f32 %v313, 0.70710677
    %v616 = vmul.f32 %v472, 0.70710677
    %v617 = vmul.f32 %v474, 0.70710677
    %v618 = vmul.f32 %v317, 0.70710677
    %v619 = vmul.f32 %v319, 0.70710677
    %v620 = vmul.f32 %v478, 0.70710677
    %v621 = vmul.f32 %v480, 0.70710677
    %v622 = vmul.f32 %v323, 0.70710677
    %v623 = vmul.f32 %v325, 0.70710677
    %v624 = vmul.f32 %v484, 0.70710677
    %v625 = vmul.f32 %v486, 0.70710677
    %v626 = vmul.f32 %v329, 0.70710677
    %v627 = vmul.f32 %v331, 0.70710677
    %v628 = vmul.f32 %v490, 0.70710677
    %v629 = vmul.f32 %v492, 0.70710677
    %v630 = vmul.f32 %v335, 0.70710677
    %v631 = vmul.f32 %v337, 0.70710677
    %v632 = vmul.f32 %v496, 0.70710677
    %v633 = vmul.f32 %v498, 0.70710677
    %v634 = vmul.f32 %v341, 0.70710677
    %v635 = vmul.f32 %v343, 0.70710677
    %v636 = vmul.f32 %v502, 0.70710677
    %v637 = vmul.f32 %v504, 0.70710677
    %v638 = vmul.f32 %v347, 0.70710677
    %v639 = vmul.f32 %v349, 0.70710677
    %v640 = vmul.f32 %v508, 0.70710677
    %v641 = vmul.f32 %v510, 0.70710677
    %v642 = vmul.f32 %v353, 0.70710677
    %v643 = vmul.f32 %v355, 0.70710677
    %v644 = vmul.f32 %v514, 0.70710677
    %v645 = vmul.f32 %v516, 0.70710677
    %v646 = vand.u32 2147483647, %v582
    %v647 = vand.u32 2147483647, %v583
    %v648 = vand.u32 2147483647, %v584
    %v649 = vand.u32 2147483647, %v585
    %v650 = vand.u32 2147483647, %v586
    %v651 = vand.u32 2147483647, %v587
    %v652 = vand.u32 2147483647, %v588
    %v653 = vand.u32 2147483647, %v589
    %v654 = vand.u32 2147483647, %v590
    %v655 = vand.u32 2147483647, %v591
    %v656 = vand.u32 2147483647, %v592
    %v657 = vand.u32 2147483647, %v593
    %v658 = vand.u32 2147483647, %v594
    %v659 = vand.u32 2147483647, %v595
    %v660 = vand.u32 2147483647, %v596
    %v661 = vand.u32 2147483647, %v597
    %v662 = vand.u32 2147483647, %v598
    %v663 = vand.u32 2147483647, %v599
    %v664 = vand.u32 2147483647, %v600
    %v665 = vand.u32 2147483647, %v601
    %v666 = vand.u32 2147483647, %v602
    %v667 = vand.u32 2147483647, %v603
    %v668 = vand.u32 2147483647, %v604
    %v669 = vand.u32 2147483647, %v605
    %v670 = vand.u32 2147483647, %v606
    %v671 = vand.u32 2147483647, %v607
    %v672 = vand.u32 2147483647, %v608
    %v673 = vand.u32 2147483647, %v609
    %v674 = vand.u32 2147483647, %v610
    %v675 = vand.u32 2147483647, %v611
    %v676 = vand.u32 2147483647, %v612
    %v677 = vand.u32 2147483647, %v613
    %v678 = vand.u32 2147483647, %v614
    %v679 = vand.u32 2147483647, %v615
    %v680 = vand.u32 2147483647, %v616
    %v681 = vand.u32 2147483647, %v617
    %v682 = vand.u32 2147483647, %v618
    %v683 = vand.u32 2147483647, %v619
    %v684 = vand.u32 2147483647, %v620
    %v685 = vand.u32 2147483647, %v621
    %v686 = vand.u32 2147483647, %v622
    %v687 = vand.u32 2147483647, %v623
    %v688 = vand.u32 2147483647, %v624
    %v689 = vand.u32 2147483647, %v625
    %v690 = vand.u32 2147483647, %v626
    %v691 = vand.u32 2147483647, %v627
    %v692 = vand.u32 2147483647, %v628
    %v693 = vand.u32 2147483647, %v629
    %v694 = vand.u32 2147483647, %v630
    %v695 = vand.u32 2147483647, %v631
    %v696 = vand.u32 2147483647, %v632
    %v697 = vand.u32 2147483647, %v633
    %v698 = vand.u32 2147483647, %v634
    %v699 = vand.u32 2147483647, %v635
    %v700 = vand.u32 2147483647, %v636
    %v701 = vand.u32 2147483647, %v637
    %v702 = vand.u32 2147483647, %v638
    %v703 = vand.u32 2147483647, %v639
    %v704 = vand.u32 2147483647, %v640
    %v705 = vand.u32 2147483647, %v641
    %v706 = vand.u32 2147483647, %v642
    %v707 = vand.u32 2147483647, %v643
    %v708 = vand.u32 2147483647, %v644
    %v709 = vand.u32 2147483647, %v645
    %v710 = vmul.f32 %v646, 0.3275911
    %v711 = vmul.f32 %v647, 0.3275911
    %v712 = vmul.f32 %v648, 0.3275911
    %v713 = vmul.f32 %v649, 0.3275911
    %v714 = vmul.f32 %v650, 0.3275911
    %v715 = vmul.f32 %v651, 0.3275911
    %v716 = vmul.f32 %v652, 0.3275911
    %v717 = vmul.f32 %v653, 0.3275911
    %v718 = vmul.f32 %v654, 0.3275911
    %v719 = vmul.f32 %v655, 0.3275911
    %v720 = vmul.f32 %v656, 0.3275911
    %v721 = vmul.f32 %v657, 0.3275911
    %v722 = vmul.f32 %v658, 0.3275911
    %v723 = vmul.f32 %v659, 0.3275911
    %v724 = vmul.f32 %v660, 0.3275911
    %v725 = vmul.f32 %v661, 0.3275911
    %v726 = vmul.f32 %v662, 0.3275911
    %v727 = vmul.f32 %v663, 0.3275911
    %v728 = vmul.f32 %v664, 0.3275911
    %v729 = vmul.f32 %v665, 0.3275911
    %v730 = vmul.f32 %v666, 0.3275911
    %v731 = vmul.f32 %v667, 0.3275911
    %v732 = vmul.f32 %v668, 0.3275911
    %v733 = vmul.f32 %v669, 0.3275911
    %v734 = vmul.f32 %v670, 0.3275911
    %v735 = vmul.f32 %v671, 0.3275911
    %v736 = vmul.f32 %v672, 0.3275911
    %v737 = vmul.f32 %v673, 0.3275911
    %v738 = vmul.f32 %v674, 0.3275911
    %v739 = vmul.f32 %v675, 0.3275911
    %v740 = vmul.f32 %v676, 0.3275911
    %v741 = vmul.f32 %v677, 0.3275911
    %v742 = vmul.f32 %v678, 0.3275911
    %v743 = vmul.f32 %v679, 0.3275911
    %v744 = vmul.f32 %v680, 0.3275911
    %v745 = vmul.f32 %v681, 0.3275911
    %v746 = vmul.f32 %v682, 0.3275911
    %v747 = vmul.f32 %v683, 0.3275911
    %v748 = vmul.f32 %v684, 0.3275911
    %v749 = vmul.f32 %v685, 0.3275911
    %v750 = vmul.f32 %v686, 0.3275911
    %v751 = vmul.f32 %v687, 0.3275911
    %v752 = vmul.f32 %v688, 0.3275911
    %v753 = vmul.f32 %v689, 0.3275911
    %v754 = vmul.f32 %v690, 0.3275911
    %v755 = vmul.f32 %v691, 0.3275911
    %v756 = vmul.f32 %v692, 0.3275911
    %v757 = vmul.f32 %v693, 0.3275911
    %v758 = vmul.f32 %v694, 0.3275911
    %v759 = vmul.f32 %v695, 0.3275911
    %v760 = vmul.f32 %v696, 0.3275911
    %v761 = vmul.f32 %v697, 0.3275911
    %v762 = vmul.f32 %v698, 0.3275911
    %v763 = vmul.f32 %v699, 0.3275911
    %v764 = vmul.f32 %v700, 0.3275911
    %v765 = vmul.f32 %v701, 0.3275911
    %v766 = vmul.f32 %v702, 0.3275911
    %v767 = vmul.f32 %v703, 0.3275911
    %v768 = vmul.f32 %v704, 0.3275911
    %v769 = vmul.f32 %v705, 0.3275911
    %v770 = vmul.f32 %v706, 0.3275911
    %v771 = vmul.f32 %v707, 0.3275911
    %v772 = vmul.f32 %v708, 0.3275911
    %v773 = vmul.f32 %v709, 0.3275911
    %v774 = vadd.f32 %v710, 1.0
    %v775 = vadd.f32 %v711, 1.0
    %v776 = vadd.f32 %v712, 1.0
    %v777 = vadd.f32 %v713, 1.0
    %v778 = vadd.f32 %v714, 1.0
    %v779 = vadd.f32 %v715, 1.0
    %v780 = vadd.f32 %v716, 1.0
    %v781 = vadd.f32 %v717, 1.0
    %v782 = vadd.f32 %v718, 1.0
    %v783 = vadd.f32 %v719, 1.0
    %v784 = vadd.f32 %v720, 1.0
    %v785 = vadd.f32 %v721, 1.0
    %v786 = vadd.f32 %v722, 1.0
    %v787 = vadd.f32 %v723, 1.0
    %v788 = vadd.f32 %v724, 1.0
    %v789 = vadd.f32 %v725, 1.0
    %v790 = vadd.f32 %v726, 1.0
    %v791 = vadd.f32 %v727, 1.0
    %v792 = vadd.f32 %v728, 1.0
    %v793 = vadd.f32 %v729, 1.0
    %v794 = vadd.f32 %v730, 1.0
    %v795 = vadd.f32 %v731, 1.0
    %v796 = vadd.f32 %v732, 1.0
    %v797 = vadd.f32 %v733, 1.0
    %v798 = vadd.f32 %v734, 1.0
    %v799 = vadd.f32 %v735, 1.0
    %v800 = vadd.f32 %v736, 1.0
    %v801 = vadd.f32 %v737, 1.0
    %v802 = vadd.f32 %v738, 1.0
    %v803 = vadd.f32 %v739, 1.0
    %v804 = vadd.f32 %v740, 1.0
    %v805 = vadd.f32 %v741, 1.0
    %v806 = vadd.f32 %v742, 1.0
    %v807 = vadd.f32 %v743, 1.0
    %v808 = vadd.f32 %v744, 1.0
    %v809 = vadd.f32 %v745, 1.0
    %v810 = vadd.f32 %v746, 1.0
    %v811 = vadd.f32 %v747, 1.0
    %v812 = vadd.f32 %v748, 1.0
    %v813 = vadd.f32 %v749, 1.0
    %v814 = vadd.f32 %v750, 1.0
    %v815 = vadd.f32 %v751, 1.0
    %v816 = vadd.f32 %v752, 1.0
    %v817 = vadd.f32 %v753, 1.0
    %v818 = vadd.f32 %v754, 1.0
    %v819 = vadd.f32 %v755, 1.0
    %v820 = vadd.f32 %v756, 1.0
    %v821 = vadd.f32 %v757, 1.0
    %v822 = vadd.f32 %v758, 1.0
    %v823 = vadd.f32 %v759, 1.0
    %v824 = vadd.f32 %v760, 1.0
    %v825 = vadd.f32 %v761, 1.0
    %v826 = vadd.f32 %v762, 1.0
    %v827 = vadd.f32 %v763, 1.0
    %v828 = vadd.f32 %v764, 1.0
    %v829 = vadd.f32 %v765, 1.0
    %v830 = vadd.f32 %v766, 1.0
    %v831 = vadd.f32 %v767, 1.0
    %v832 = vadd.f32 %v768, 1.0
    %v833 = vadd.f32 %v769, 1.0
    %v834 = vadd.f32 %v770, 1.0
    %v835 = vadd.f32 %v771, 1.0
    %v836 = vadd.f32 %v772, 1.0
    %v837 = vadd.f32 %v773, 1.0
    %v838 = vrcp.pop %v774
    %v839 = vmul.f32 1.0, %v838
    %v840 = vrcp.pop %v775
    %v841 = vmul.f32 1.0, %v840
    %v842 = vrcp.pop %v776
    %v843 = vmul.f32 1.0, %v842
    %v844 = vrcp.pop %v777
    %v845 = vmul.f32 1.0, %v844
    %v846 = vrcp.pop %v778
    %v847 = vmul.f32 1.0, %v846
    %v848 = vrcp.pop %v779
    %v849 = vmul.f32 1.0, %v848
    %v850 = vrcp.pop %v780
    %v851 = vmul.f32 1.0, %v850
    %v852 = vrcp.pop %v781
    %v853 = vmul.f32 1.0, %v852
    %v854 = vrcp.pop %v782
    %v855 = vmul.f32 1.0, %v854
    %v856 = vrcp.pop %v783
    %v857 = vmul.f32 1.0, %v856
    %v858 = vrcp.pop %v784
    %v859 = vmul.f32 1.0, %v858
    %v860 = vrcp.pop %v785
    %v861 = vmul.f32 1.0, %v860
    %v862 = vrcp.pop %v786
    %v863 = vmul.f32 1.0, %v862
    %v864 = vrcp.pop %v787
    %v865 = vmul.f32 1.0, %v864
    %v866 = vrcp.pop %v788
    %v867 = vmul.f32 1.0, %v866
    %v868 = vrcp.pop %v789
    %v869 = vmul.f32 1.0, %v868
    %v870 = vrcp.pop %v790
    %v871 = vmul.f32 1.0, %v870
    %v872 = vrcp.pop %v791
    %v873 = vmul.f32 1.0, %v872
    %v874 = vrcp.pop %v792
    %v875 = vmul.f32 1.0, %v874
    %v876 = vrcp.pop %v793
    %v877 = vmul.f32 1.0, %v876
    %v878 = vrcp.pop %v794
    %v879 = vmul.f32 1.0, %v878
    %v880 = vrcp.pop %v795
    %v881 = vmul.f32 1.0, %v880
    %v882 = vrcp.pop %v796
    %v883 = vmul.f32 1.0, %v882
    %v884 = vrcp.pop %v797
    %v885 = vmul.f32 1.0, %v884
    %v886 = vrcp.pop %v798
    %v887 = vmul.f32 1.0, %v886
    %v888 = vrcp.pop %v799
    %v889 = vmul.f32 1.0, %v888
    %v890 = vrcp.pop %v800
    %v891 = vmul.f32 1.0, %v890
    %v892 = vrcp.pop %v801
    %v893 = vmul.f32 1.0, %v892
    %v894 = vrcp.pop %v802
    %v895 = vmul.f32 1.0, %v894
    %v896 = vrcp.pop %v803
    %v897 = vmul.f32 1.0, %v896
    %v898 = vrcp.pop %v804
    %v899 = vmul.f32 1.0, %v898
    %v900 = vrcp.pop %v805
    %v901 = vmul.f32 1.0, %v900
    %v902 = vrcp.pop %v806
    %v903 = vmul.f32 1.0, %v902
    %v904 = vrcp.pop %v807
    %v905 = vmul.f32 1.0, %v904
    %v906 = vrcp.pop %v808
    %v907 = vmul.f32 1.0, %v906
    %v908 = vrcp.pop %v809
    %v909 = vmul.f32 1.0, %v908
    %v910 = vrcp.pop %v810
    %v911 = vmul.f32 1.0, %v910
    %v912 = vrcp.pop %v811
    %v913 = vmul.f32 1.0, %v912
    %v914 = vrcp.pop %v812
    %v915 = vmul.f32 1.0, %v914
    %v916 = vrcp.pop %v813
    %v917 = vmul.f32 1.0, %v916
    %v918 = vrcp.pop %v814
    %v919 = vmul.f32 1.0, %v918
    %v920 = vrcp.pop %v815
    %v921 = vmul.f32 1.0, %v920
    %v922 = vrcp.pop %v816
    %v923 = vmul.f32 1.0, %v922
    %v924 = vrcp.pop %v817
    %v925 = vmul.f32 1.0, %v924
    %v926 = vrcp.pop %v818
    %v927 = vmul.f32 1.0, %v926
    %v928 = vrcp.pop %v819
    %v929 = vmul.f32 1.0, %v928
    %v930 = vrcp.pop %v820
    %v931 = vmul.f32 1.0, %v930
    %v932 = vrcp.pop %v821
    %v933 = vmul.f32 1.0, %v932
    %v934 = vrcp.pop %v822
    %v935 = vmul.f32 1.0, %v934
    %v936 = vrcp.pop %v823
    %v937 = vmul.f32 1.0, %v936
    %v938 = vrcp.pop %v824
    %v939 = vmul.f32 1.0, %v938
    %v940 = vrcp.pop %v825
    %v941 = vmul.f32 1.0, %v940
    %v942 = vrcp.pop %v826
    %v943 = vmul.f32 1.0, %v942
    %v944 = vrcp.pop %v827
    %v945 = vmul.f32 1.0, %v944
    %v946 = vrcp.pop %v828
    %v947 = vmul.f32 1.0, %v946
    %v948 = vrcp.pop %v829
    %v949 = vmul.f32 1.0, %v948
    %v950 = vrcp.pop %v830
    %v951 = vmul.f32 1.0, %v950
    %v952 = vrcp.pop %v831
    %v953 = vmul.f32 1.0, %v952
    %v954 = vrcp.pop %v832
    %v955 = vmul.f32 1.0, %v954
    %v956 = vrcp.pop %v833
    %v957 = vmul.f32 1.0, %v956
    %v958 = vrcp.pop %v834
    %v959 = vmul.f32 1.0, %v958
    %v960 = vrcp.pop %v835
    %v961 = vmul.f32 1.0, %v960
    %v962 = vrcp.pop %v836
    %v963 = vmul.f32 1.0, %v962
    %v964 = vrcp.pop %v837
    %v965 = vmul.f32 1.0, %v964
    %v966 = vmul.f32 %v839, 1.0614054
    %v967 = vmul.f32 %v841, 1.0614054
    %v968 = vmul.f32 %v843, 1.0614054
    %v969 = vmul.f32 %v845, 1.0614054
    %v970 = vmul.f32 %v847, 1.0614054
    %v971 = vmul.f32 %v849, 1.0614054
    %v972 = vmul.f32 %v851, 1.0614054
    %v973 = vmul.f32 %v853, 1.0614054
    %v974 = vmul.f32 %v855, 1.0614054
    %v975 = vmul.f32 %v857, 1.0614054
    %v976 = vmul.f32 %v859, 1.0614054
    %v977 = vmul.f32 %v861, 1.0614054
    %v978 = vmul.f32 %v863, 1.0614054
    %v979 = vmul.f32 %v865, 1.0614054
    %v980 = vmul.f32 %v867, 1.0614054
    %v981 = vmul.f32 %v869, 1.0614054
    %v982 = vmul.f32 %v871, 1.0614054
    %v983 = vmul.f32 %v873, 1.0614054
    %v984 = vmul.f32 %v875, 1.0614054
    %v985 = vmul.f32 %v877, 1.0614054
    %v986 = vmul.f32 %v879, 1.0614054
    %v987 = vmul.f32 %v881, 1.0614054
    %v988 = vmul.f32 %v883, 1.0614054
    %v989 = vmul.f32 %v885, 1.0614054
    %v990 = vmul.f32 %v887, 1.0614054
    %v991 = vmul.f32 %v889, 1.0614054
    %v992 = vmul.f32 %v891, 1.0614054
    %v993 = vmul.f32 %v893, 1.0614054
    %v994 = vmul.f32 %v895, 1.0614054
    %v995 = vmul.f32 %v897, 1.0614054
    %v996 = vmul.f32 %v899, 1.0614054
    %v997 = vmul.f32 %v901, 1.0614054
    %v998 = vmul.f32 %v903, 1.0614054
    %v999 = vmul.f32 %v905, 1.0614054
    %v1000 = vmul.f32 %v907, 1.0614054
    %v1001 = vmul.f32 %v909, 1.0614054
    %v1002 = vmul.f32 %v911, 1.0614054
    %v1003 = vmul.f32 %v913, 1.0614054
    %v1004 = vmul.f32 %v915, 1.0614054
    %v1005 = vmul.f32 %v917, 1.0614054
    %v1006 = vmul.f32 %v919, 1.0614054
    %v1007 = vmul.f32 %v921, 1.0614054
    %v1008 = vmul.f32 %v923, 1.0614054
    %v1009 = vmul.f32 %v925, 1.0614054
    %v1010 = vmul.f32 %v927, 1.0614054
    %v1011 = vmul.f32 %v929, 1.0614054
    %v1012 = vmul.f32 %v931, 1.0614054
    %v1013 = vmul.f32 %v933, 1.0614054
    %v1014 = vmul.f32 %v935, 1.0614054
    %v1015 = vmul.f32 %v937, 1.0614054
    %v1016 = vmul.f32 %v939, 1.0614054
    %v1017 = vmul.f32 %v941, 1.0614054
    %v1018 = vmul.f32 %v943, 1.0614054
    %v1019 = vmul.f32 %v945, 1.0614054
    %v1020 = vmul.f32 %v947, 1.0614054
    %v1021 = vmul.f32 %v949, 1.0614054
    %v1022 = vmul.f32 %v951, 1.0614054
    %v1023 = vmul.f32 %v953, 1.0614054
    %v1024 = vmul.f32 %v955, 1.0614054
    %v1025 = vmul.f32 %v957, 1.0614054
    %v1026 = vmul.f32 %v959, 1.0614054
    %v1027 = vmul.f32 %v961, 1.0614054
    %v1028 = vmul.f32 %v963, 1.0614054
    %v1029 = vmul.f32 %v965, 1.0614054
    %v1030 = vadd.f32 %v966, -1.4531521
    %v1031 = vadd.f32 %v967, -1.4531521
    %v1032 = vadd.f32 %v968, -1.4531521
    %v1033 = vadd.f32 %v969, -1.4531521
    %v1034 = vadd.f32 %v970, -1.4531521
    %v1035 = vadd.f32 %v971, -1.4531521
    %v1036 = vadd.f32 %v972, -1.4531521
    %v1037 = vadd.f32 %v973, -1.4531521
    %v1038 = vadd.f32 %v974, -1.4531521
    %v1039 = vadd.f32 %v975, -1.4531521
    %v1040 = vadd.f32 %v976, -1.4531521
    %v1041 = vadd.f32 %v977, -1.4531521
    %v1042 = vadd.f32 %v978, -1.4531521
    %v1043 = vadd.f32 %v979, -1.4531521
    %v1044 = vadd.f32 %v980, -1.4531521
    %v1045 = vadd.f32 %v981, -1.4531521
    %v1046 = vadd.f32 %v982, -1.4531521
    %v1047 = vadd.f32 %v983, -1.4531521
    %v1048 = vadd.f32 %v984, -1.4531521
    %v1049 = vadd.f32 %v985, -1.4531521
    %v1050 = vadd.f32 %v986, -1.4531521
    %v1051 = vadd.f32 %v987, -1.4531521
    %v1052 = vadd.f32 %v988, -1.4531521
    %v1053 = vadd.f32 %v989, -1.4531521
    %v1054 = vadd.f32 %v990, -1.4531521
    %v1055 = vadd.f32 %v991, -1.4531521
    %v1056 = vadd.f32 %v992, -1.4531521
    %v1057 = vadd.f32 %v993, -1.4531521
    %v1058 = vadd.f32 %v994, -1.4531521
    %v1059 = vadd.f32 %v995, -1.4531521
    %v1060 = vadd.f32 %v996, -1.4531521
    %v1061 = vadd.f32 %v997, -1.4531521
    %v1062 = vadd.f32 %v998, -1.4531521
    %v1063 = vadd.f32 %v999, -1.4531521
    %v1064 = vadd.f32 %v1000, -1.4531521
    %v1065 = vadd.f32 %v1001, -1.4531521
    %v1066 = vadd.f32 %v1002, -1.4531521
    %v1067 = vadd.f32 %v1003, -1.4531521
    %v1068 = vadd.f32 %v1004, -1.4531521
    %v1069 = vadd.f32 %v1005, -1.4531521
    %v1070 = vadd.f32 %v1006, -1.4531521
    %v1071 = vadd.f32 %v1007, -1.4531521
    %v1072 = vadd.f32 %v1008, -1.4531521
    %v1073 = vadd.f32 %v1009, -1.4531521
    %v1074 = vadd.f32 %v1010, -1.4531521
    %v1075 = vadd.f32 %v1011, -1.4531521
    %v1076 = vadd.f32 %v1012, -1.4531521
    %v1077 = vadd.f32 %v1013, -1.4531521
    %v1078 = vadd.f32 %v1014, -1.4531521
    %v1079 = vadd.f32 %v1015, -1.4531521
    %v1080 = vadd.f32 %v1016, -1.4531521
    %v1081 = vadd.f32 %v1017, -1.4531521
    %v1082 = vadd.f32 %v1018, -1.4531521
    %v1083 = vadd.f32 %v1019, -1.4531521
    %v1084 = vadd.f32 %v1020, -1.4531521
    %v1085 = vadd.f32 %v1021, -1.4531521
    %v1086 = vadd.f32 %v1022, -1.4531521
    %v1087 = vadd.f32 %v1023, -1.4531521
    %v1088 = vadd.f32 %v1024, -1.4531521
    %v1089 = vadd.f32 %v1025, -1.4531521
    %v1090 = vadd.f32 %v1026, -1.4531521
    %v1091 = vadd.f32 %v1027, -1.4531521
    %v1092 = vadd.f32 %v1028, -1.4531521
    %v1093 = vadd.f32 %v1029, -1.4531521
    %v1094 = vmul.f32 %v839, %v1030
    %v1095 = vmul.f32 %v841, %v1031
    %v1096 = vmul.f32 %v843, %v1032
    %v1097 = vmul.f32 %v845, %v1033
    %v1098 = vmul.f32 %v847, %v1034
    %v1099 = vmul.f32 %v849, %v1035
    %v1100 = vmul.f32 %v851, %v1036
    %v1101 = vmul.f32 %v853, %v1037
    %v1102 = vmul.f32 %v855, %v1038
    %v1103 = vmul.f32 %v857, %v1039
    %v1104 = vmul.f32 %v859, %v1040
    %v1105 = vmul.f32 %v861, %v1041
    %v1106 = vmul.f32 %v863, %v1042
    %v1107 = vmul.f32 %v865, %v1043
    %v1108 = vmul.f32 %v867, %v1044
    %v1109 = vmul.f32 %v869, %v1045
    %v1110 = vmul.f32 %v871, %v1046
    %v1111 = vmul.f32 %v873, %v1047
    %v1112 = vmul.f32 %v875, %v1048
    %v1113 = vmul.f32 %v877, %v1049
    %v1114 = vmul.f32 %v879, %v1050
    %v1115 = vmul.f32 %v881, %v1051
    %v1116 = vmul.f32 %v883, %v1052
    %v1117 = vmul.f32 %v885, %v1053
    %v1118 = vmul.f32 %v887, %v1054
    %v1119 = vmul.f32 %v889, %v1055
    %v1120 = vmul.f32 %v891, %v1056
    %v1121 = vmul.f32 %v893, %v1057
    %v1122 = vmul.f32 %v895, %v1058
    %v1123 = vmul.f32 %v897, %v1059
    %v1124 = vmul.f32 %v899, %v1060
    %v1125 = vmul.f32 %v901, %v1061
    %v1126 = vmul.f32 %v903, %v1062
    %v1127 = vmul.f32 %v905, %v1063
    %v1128 = vmul.f32 %v907, %v1064
    %v1129 = vmul.f32 %v909, %v1065
    %v1130 = vmul.f32 %v911, %v1066
    %v1131 = vmul.f32 %v913, %v1067
    %v1132 = vmul.f32 %v915, %v1068
    %v1133 = vmul.f32 %v917, %v1069
    %v1134 = vmul.f32 %v919, %v1070
    %v1135 = vmul.f32 %v921, %v1071
    %v1136 = vmul.f32 %v923, %v1072
    %v1137 = vmul.f32 %v925, %v1073
    %v1138 = vmul.f32 %v927, %v1074
    %v1139 = vmul.f32 %v929, %v1075
    %v1140 = vmul.f32 %v931, %v1076
    %v1141 = vmul.f32 %v933, %v1077
    %v1142 = vmul.f32 %v935, %v1078
    %v1143 = vmul.f32 %v937, %v1079
    %v1144 = vmul.f32 %v939, %v1080
    %v1145 = vmul.f32 %v941, %v1081
    %v1146 = vmul.f32 %v943, %v1082
    %v1147 = vmul.f32 %v945, %v1083
    %v1148 = vmul.f32 %v947, %v1084
    %v1149 = vmul.f32 %v949, %v1085
    %v1150 = vmul.f32 %v951, %v1086
    %v1151 = vmul.f32 %v953, %v1087
    %v1152 = vmul.f32 %v955, %v1088
    %v1153 = vmul.f32 %v957, %v1089
    %v1154 = vmul.f32 %v959, %v1090
    %v1155 = vmul.f32 %v961, %v1091
    %v1156 = vmul.f32 %v963, %v1092
    %v1157 = vmul.f32 %v965, %v1093
    %v1158 = vadd.f32 %v1094, 1.4214138
    %v1159 = vadd.f32 %v1095, 1.4214138
    %v1160 = vadd.f32 %v1096, 1.4214138
    %v1161 = vadd.f32 %v1097, 1.4214138
    %v1162 = vadd.f32 %v1098, 1.4214138
    %v1163 = vadd.f32 %v1099, 1.4214138
    %v1164 = vadd.f32 %v1100, 1.4214138
    %v1165 = vadd.f32 %v1101, 1.4214138
    %v1166 = vadd.f32 %v1102, 1.4214138
    %v1167 = vadd.f32 %v1103, 1.4214138
    %v1168 = vadd.f32 %v1104, 1.4214138
    %v1169 = vadd.f32 %v1105, 1.4214138
    %v1170 = vadd.f32 %v1106, 1.4214138
    %v1171 = vadd.f32 %v1107, 1.4214138
    %v1172 = vadd.f32 %v1108, 1.4214138
    %v1173 = vadd.f32 %v1109, 1.4214138
    %v1174 = vadd.f32 %v1110, 1.4214138
    %v1175 = vadd.f32 %v1111, 1.4214138
    %v1176 = vadd.f32 %v1112, 1.4214138
    %v1177 = vadd.f32 %v1113, 1.4214138
    %v1178 = vadd.f32 %v1114, 1.4214138
    %v1179 = vadd.f32 %v1115, 1.4214138
    %v1180 = vadd.f32 %v1116, 1.4214138
    %v1181 = vadd.f32 %v1117, 1.4214138
    %v1182 = vadd.f32 %v1118, 1.4214138
    %v1183 = vadd.f32 %v1119, 1.4214138
    %v1184 = vadd.f32 %v1120, 1.4214138
    %v1185 = vadd.f32 %v1121, 1.4214138
    %v1186 = vadd.f32 %v1122, 1.4214138
    %v1187 = vadd.f32 %v1123, 1.4214138
    %v1188 = vadd.f32 %v1124, 1.4214138
    %v1189 = vadd.f32 %v1125, 1.4214138
    %v1190 = vadd.f32 %v1126, 1.4214138
    %v1191 = vadd.f32 %v1127, 1.4214138
    %v1192 = vadd.f32 %v1128, 1.4214138
    %v1193 = vadd.f32 %v1129, 1.4214138
    %v1194 = vadd.f32 %v1130, 1.4214138
    %v1195 = vadd.f32 %v1131, 1.4214138
    %v1196 = vadd.f32 %v1132, 1.4214138
    %v1197 = vadd.f32 %v1133, 1.4214138
    %v1198 = vadd.f32 %v1134, 1.4214138
    %v1199 = vadd.f32 %v1135, 1.4214138
    %v1200 = vadd.f32 %v1136, 1.4214138
    %v1201 = vadd.f32 %v1137, 1.4214138
    %v1202 = vadd.f32 %v1138, 1.4214138
    %v1203 = vadd.f32 %v1139, 1.4214138
    %v1204 = vadd.f32 %v1140, 1.4214138
    %v1205 = vadd.f32 %v1141, 1.4214138
    %v1206 = vadd.f32 %v1142, 1.4214138
    %v1207 = vadd.f32 %v1143, 1.4214138
    %v1208 = vadd.f32 %v1144, 1.4214138
    %v1209 = vadd.f32 %v1145, 1.4214138
    %v1210 = vadd.f32 %v1146, 1.4214138
    %v1211 = vadd.f32 %v1147, 1.4214138
    %v1212 = vadd.f32 %v1148, 1.4214138
    %v1213 = vadd.f32 %v1149, 1.4214138
    %v1214 = vadd.f32 %v1150, 1.4214138
    %v1215 = vadd.f32 %v1151, 1.4214138
    %v1216 = vadd.f32 %v1152, 1.4214138
    %v1217 = vadd.f32 %v1153, 1.4214138
    %v1218 = vadd.f32 %v1154, 1.4214138
    %v1219 = vadd.f32 %v1155, 1.4214138
    %v1220 = vadd.f32 %v1156, 1.4214138
    %v1221 = vadd.f32 %v1157, 1.4214138
    %v1222 = vmul.f32 %v839, %v1158
    %v1223 = vmul.f32 %v841, %v1159
    %v1224 = vmul.f32 %v843, %v1160
    %v1225 = vmul.f32 %v845, %v1161
    %v1226 = vmul.f32 %v847, %v1162
    %v1227 = vmul.f32 %v849, %v1163
    %v1228 = vmul.f32 %v851, %v1164
    %v1229 = vmul.f32 %v853, %v1165
    %v1230 = vmul.f32 %v855, %v1166
    %v1231 = vmul.f32 %v857, %v1167
    %v1232 = vmul.f32 %v859, %v1168
    %v1233 = vmul.f32 %v861, %v1169
    %v1234 = vmul.f32 %v863, %v1170
    %v1235 = vmul.f32 %v865, %v1171
    %v1236 = vmul.f32 %v867, %v1172
    %v1237 = vmul.f32 %v869, %v1173
    %v1238 = vmul.f32 %v871, %v1174
    %v1239 = vmul.f32 %v873, %v1175
    %v1240 = vmul.f32 %v875, %v1176
    %v1241 = vmul.f32 %v877, %v1177
    %v1242 = vmul.f32 %v879, %v1178
    %v1243 = vmul.f32 %v881, %v1179
    %v1244 = vmul.f32 %v883, %v1180
    %v1245 = vmul.f32 %v885, %v1181
    %v1246 = vmul.f32 %v887, %v1182
    %v1247 = vmul.f32 %v889, %v1183
    %v1248 = vmul.f32 %v891, %v1184
    %v1249 = vmul.f32 %v893, %v1185
    %v1250 = vmul.f32 %v895, %v1186
    %v1251 = vmul.f32 %v897, %v1187
    %v1252 = vmul.f32 %v899, %v1188
    %v1253 = vmul.f32 %v901, %v1189
    %v1254 = vmul.f32 %v903, %v1190
    %v1255 = vmul.f32 %v905, %v1191
    %v1256 = vmul.f32 %v907, %v1192
    %v1257 = vmul.f32 %v909, %v1193
    %v1258 = vmul.f32 %v911, %v1194
    %v1259 = vmul.f32 %v913, %v1195
    %v1260 = vmul.f32 %v915, %v1196
    %v1261 = vmul.f32 %v917, %v1197
    %v1262 = vmul.f32 %v919, %v1198
    %v1263 = vmul.f32 %v921, %v1199
    %v1264 = vmul.f32 %v923, %v1200
    %v1265 = vmul.f32 %v925, %v1201
    %v1266 = vmul.f32 %v927, %v1202
    %v1267 = vmul.f32 %v929, %v1203
    %v1268 = vmul.f32 %v931, %v1204
    %v1269 = vmul.f32 %v933, %v1205
    %v1270 = vmul.f32 %v935, %v1206
    %v1271 = vmul.f32 %v937, %v1207
    %v1272 = vmul.f32 %v939, %v1208
    %v1273 = vmul.f32 %v941, %v1209
    %v1274 = vmul.f32 %v943, %v1210
    %v1275 = vmul.f32 %v945, %v1211
    %v1276 = vmul.f32 %v947, %v1212
    %v1277 = vmul.f32 %v949, %v1213
    %v1278 = vmul.f32 %v951, %v1214
    %v1279 = vmul.f32 %v953, %v1215
    %v1280 = vmul.f32 %v955, %v1216
    %v1281 = vmul.f32 %v957, %v1217
    %v1282 = vmul.f32 %v959, %v1218
    %v1283 = vmul.f32 %v961, %v1219
    %v1284 = vmul.f32 %v963, %v1220
    %v1285 = vmul.f32 %v965, %v1221
    %v1286 = vadd.f32 %v1222, -0.28449672
    %v1287 = vadd.f32 %v1223, -0.28449672
    %v1288 = vadd.f32 %v1224, -0.28449672
    %v1289 = vadd.f32 %v1225, -0.28449672
    %v1290 = vadd.f32 %v1226, -0.28449672
    %v1291 = vadd.f32 %v1227, -0.28449672
    %v1292 = vadd.f32 %v1228, -0.28449672
    %v1293 = vadd.f32 %v1229, -0.28449672
    %v1294 = vadd.f32 %v1230, -0.28449672
    %v1295 = vadd.f32 %v1231, -0.28449672
    %v1296 = vadd.f32 %v1232, -0.28449672
    %v1297 = vadd.f32 %v1233, -0.28449672
    %v1298 = vadd.f32 %v1234, -0.28449672
    %v1299 = vadd.f32 %v1235, -0.28449672
    %v1300 = vadd.f32 %v1236, -0.28449672
    %v1301 = vadd.f32 %v1237, -0.28449672
    %v1302 = vadd.f32 %v1238, -0.28449672
    %v1303 = vadd.f32 %v1239, -0.28449672
    %v1304 = vadd.f32 %v1240, -0.28449672
    %v1305 = vadd.f32 %v1241, -0.28449672
    %v1306 = vadd.f32 %v1242, -0.28449672
    %v1307 = vadd.f32 %v1243, -0.28449672
    %v1308 = vadd.f32 %v1244, -0.28449672
    %v1309 = vadd.f32 %v1245, -0.28449672
    %v1310 = vadd.f32 %v1246, -0.28449672
    %v1311 = vadd.f32 %v1247, -0.28449672
    %v1312 = vadd.f32 %v1248, -0.28449672
    %v1313 = vadd.f32 %v1249, -0.28449672
    %v1314 = vadd.f32 %v1250, -0.28449672
    %v1315 = vadd.f32 %v1251, -0.28449672
    %v1316 = vadd.f32 %v1252, -0.28449672
    %v1317 = vadd.f32 %v1253, -0.28449672
    %v1318 = vadd.f32 %v1254, -0.28449672
    %v1319 = vadd.f32 %v1255, -0.28449672
    %v1320 = vadd.f32 %v1256, -0.28449672
    %v1321 = vadd.f32 %v1257, -0.28449672
    %v1322 = vadd.f32 %v1258, -0.28449672
    %v1323 = vadd.f32 %v1259, -0.28449672
    %v1324 = vadd.f32 %v1260, -0.28449672
    %v1325 = vadd.f32 %v1261, -0.28449672
    %v1326 = vadd.f32 %v1262, -0.28449672
    %v1327 = vadd.f32 %v1263, -0.28449672
    %v1328 = vadd.f32 %v1264, -0.28449672
    %v1329 = vadd.f32 %v1265, -0.28449672
    %v1330 = vadd.f32 %v1266, -0.28449672
    %v1331 = vadd.f32 %v1267, -0.28449672
    %v1332 = vadd.f32 %v1268, -0.28449672
    %v1333 = vadd.f32 %v1269, -0.28449672
    %v1334 = vadd.f32 %v1270, -0.28449672
    %v1335 = vadd.f32 %v1271, -0.28449672
    %v1336 = vadd.f32 %v1272, -0.28449672
    %v1337 = vadd.f32 %v1273, -0.28449672
    %v1338 = vadd.f32 %v1274, -0.28449672
    %v1339 = vadd.f32 %v1275, -0.28449672
    %v1340 = vadd.f32 %v1276, -0.28449672
    %v1341 = vadd.f32 %v1277, -0.28449672
    %v1342 = vadd.f32 %v1278, -0.28449672
    %v1343 = vadd.f32 %v1279, -0.28449672
    %v1344 = vadd.f32 %v1280, -0.28449672
    %v1345 = vadd.f32 %v1281, -0.28449672
    %v1346 = vadd.f32 %v1282, -0.28449672
    %v1347 = vadd.f32 %v1283, -0.28449672
    %v1348 = vadd.f32 %v1284, -0.28449672
    %v1349 = vadd.f32 %v1285, -0.28449672
    %v1350 = vmul.f32 %v839, %v1286
    %v1351 = vmul.f32 %v841, %v1287
    %v1352 = vmul.f32 %v843, %v1288
    %v1353 = vmul.f32 %v845, %v1289
    %v1354 = vmul.f32 %v847, %v1290
    %v1355 = vmul.f32 %v849, %v1291
    %v1356 = vmul.f32 %v851, %v1292
    %v1357 = vmul.f32 %v853, %v1293
    %v1358 = vmul.f32 %v855, %v1294
    %v1359 = vmul.f32 %v857, %v1295
    %v1360 = vmul.f32 %v859, %v1296
    %v1361 = vmul.f32 %v861, %v1297
    %v1362 = vmul.f32 %v863, %v1298
    %v1363 = vmul.f32 %v865, %v1299
    %v1364 = vmul.f32 %v867, %v1300
    %v1365 = vmul.f32 %v869, %v1301
    %v1366 = vmul.f32 %v871, %v1302
    %v1367 = vmul.f32 %v873, %v1303
    %v1368 = vmul.f32 %v875, %v1304
    %v1369 = vmul.f32 %v877, %v1305
    %v1370 = vmul.f32 %v879, %v1306
    %v1371 = vmul.f32 %v881, %v1307
    %v1372 = vmul.f32 %v883, %v1308
    %v1373 = vmul.f32 %v885, %v1309
    %v1374 = vmul.f32 %v887, %v1310
    %v1375 = vmul.f32 %v889, %v1311
    %v1376 = vmul.f32 %v891, %v1312
    %v1377 = vmul.f32 %v893, %v1313
    %v1378 = vmul.f32 %v895, %v1314
    %v1379 = vmul.f32 %v897, %v1315
    %v1380 = vmul.f32 %v899, %v1316
    %v1381 = vmul.f32 %v901, %v1317
    %v1382 = vmul.f32 %v903, %v1318
    %v1383 = vmul.f32 %v905, %v1319
    %v1384 = vmul.f32 %v907, %v1320
    %v1385 = vmul.f32 %v909, %v1321
    %v1386 = vmul.f32 %v911, %v1322
    %v1387 = vmul.f32 %v913, %v1323
    %v1388 = vmul.f32 %v915, %v1324
    %v1389 = vmul.f32 %v917, %v1325
    %v1390 = vmul.f32 %v919, %v1326
    %v1391 = vmul.f32 %v921, %v1327
    %v1392 = vmul.f32 %v923, %v1328
    %v1393 = vmul.f32 %v925, %v1329
    %v1394 = vmul.f32 %v927, %v1330
    %v1395 = vmul.f32 %v929, %v1331
    %v1396 = vmul.f32 %v931, %v1332
    %v1397 = vmul.f32 %v933, %v1333
    %v1398 = vmul.f32 %v935, %v1334
    %v1399 = vmul.f32 %v937, %v1335
    %v1400 = vmul.f32 %v939, %v1336
    %v1401 = vmul.f32 %v941, %v1337
    %v1402 = vmul.f32 %v943, %v1338
    %v1403 = vmul.f32 %v945, %v1339
    %v1404 = vmul.f32 %v947, %v1340
    %v1405 = vmul.f32 %v949, %v1341
    %v1406 = vmul.f32 %v951, %v1342
    %v1407 = vmul.f32 %v953, %v1343
    %v1408 = vmul.f32 %v955, %v1344
    %v1409 = vmul.f32 %v957, %v1345
    %v1410 = vmul.f32 %v959, %v1346
    %v1411 = vmul.f32 %v961, %v1347
    %v1412 = vmul.f32 %v963, %v1348
    %v1413 = vmul.f32 %v965, %v1349
    %v1414 = vadd.f32 %v1350, 0.2548296
    %v1415 = vadd.f32 %v1351, 0.2548296
    %v1416 = vadd.f32 %v1352, 0.2548296
    %v1417 = vadd.f32 %v1353, 0.2548296
    %v1418 = vadd.f32 %v1354, 0.2548296
    %v1419 = vadd.f32 %v1355, 0.2548296
    %v1420 = vadd.f32 %v1356, 0.2548296
    %v1421 = vadd.f32 %v1357, 0.2548296
    %v1422 = vadd.f32 %v1358, 0.2548296
    %v1423 = vadd.f32 %v1359, 0.2548296
    %v1424 = vadd.f32 %v1360, 0.2548296
    %v1425 = vadd.f32 %v1361, 0.2548296
    %v1426 = vadd.f32 %v1362, 0.2548296
    %v1427 = vadd.f32 %v1363, 0.2548296
    %v1428 = vadd.f32 %v1364, 0.2548296
    %v1429 = vadd.f32 %v1365, 0.2548296
    %v1430 = vadd.f32 %v1366, 0.2548296
    %v1431 = vadd.f32 %v1367, 0.2548296
    %v1432 = vadd.f32 %v1368, 0.2548296
    %v1433 = vadd.f32 %v1369, 0.2548296
    %v1434 = vadd.f32 %v1370, 0.2548296
    %v1435 = vadd.f32 %v1371, 0.2548296
    %v1436 = vadd.f32 %v1372, 0.2548296
    %v1437 = vadd.f32 %v1373, 0.2548296
    %v1438 = vadd.f32 %v1374, 0.2548296
    %v1439 = vadd.f32 %v1375, 0.2548296
    %v1440 = vadd.f32 %v1376, 0.2548296
    %v1441 = vadd.f32 %v1377, 0.2548296
    %v1442 = vadd.f32 %v1378, 0.2548296
    %v1443 = vadd.f32 %v1379, 0.2548296
    %v1444 = vadd.f32 %v1380, 0.2548296
    %v1445 = vadd.f32 %v1381, 0.2548296
    %v1446 = vadd.f32 %v1382, 0.2548296
    %v1447 = vadd.f32 %v1383, 0.2548296
    %v1448 = vadd.f32 %v1384, 0.2548296
    %v1449 = vadd.f32 %v1385, 0.2548296
    %v1450 = vadd.f32 %v1386, 0.2548296
    %v1451 = vadd.f32 %v1387, 0.2548296
    %v1452 = vadd.f32 %v1388, 0.2548296
    %v1453 = vadd.f32 %v1389, 0.2548296
    %v1454 = vadd.f32 %v1390, 0.2548296
    %v1455 = vadd.f32 %v1391, 0.2548296
    %v1456 = vadd.f32 %v1392, 0.2548296
    %v1457 = vadd.f32 %v1393, 0.2548296
    %v1458 = vadd.f32 %v1394, 0.2548296
    %v1459 = vadd.f32 %v1395, 0.2548296
    %v1460 = vadd.f32 %v1396, 0.2548296
    %v1461 = vadd.f32 %v1397, 0.2548296
    %v1462 = vadd.f32 %v1398, 0.2548296
    %v1463 = vadd.f32 %v1399, 0.2548296
    %v1464 = vadd.f32 %v1400, 0.2548296
    %v1465 = vadd.f32 %v1401, 0.2548296
    %v1466 = vadd.f32 %v1402, 0.2548296
    %v1467 = vadd.f32 %v1403, 0.2548296
    %v1468 = vadd.f32 %v1404, 0.2548296
    %v1469 = vadd.f32 %v1405, 0.2548296
    %v1470 = vadd.f32 %v1406, 0.2548296
    %v1471 = vadd.f32 %v1407, 0.2548296
    %v1472 = vadd.f32 %v1408, 0.2548296
    %v1473 = vadd.f32 %v1409, 0.2548296
    %v1474 = vadd.f32 %v1410, 0.2548296
    %v1475 = vadd.f32 %v1411, 0.2548296
    %v1476 = vadd.f32 %v1412, 0.2548296
    %v1477 = vadd.f32 %v1413, 0.2548296
    %v1478 = vmul.f32 %v839, %v1414
    %v1479 = vmul.f32 %v841, %v1415
    %v1480 = vmul.f32 %v843, %v1416
    %v1481 = vmul.f32 %v845, %v1417
    %v1482 = vmul.f32 %v847, %v1418
    %v1483 = vmul.f32 %v849, %v1419
    %v1484 = vmul.f32 %v851, %v1420
    %v1485 = vmul.f32 %v853, %v1421
    %v1486 = vmul.f32 %v855, %v1422
    %v1487 = vmul.f32 %v857, %v1423
    %v1488 = vmul.f32 %v859, %v1424
    %v1489 = vmul.f32 %v861, %v1425
    %v1490 = vmul.f32 %v863, %v1426
    %v1491 = vmul.f32 %v865, %v1427
    %v1492 = vmul.f32 %v867, %v1428
    %v1493 = vmul.f32 %v869, %v1429
    %v1494 = vmul.f32 %v871, %v1430
    %v1495 = vmul.f32 %v873, %v1431
    %v1496 = vmul.f32 %v875, %v1432
    %v1497 = vmul.f32 %v877, %v1433
    %v1498 = vmul.f32 %v879, %v1434
    %v1499 = vmul.f32 %v881, %v1435
    %v1500 = vmul.f32 %v883, %v1436
    %v1501 = vmul.f32 %v885, %v1437
    %v1502 = vmul.f32 %v887, %v1438
    %v1503 = vmul.f32 %v889, %v1439
    %v1504 = vmul.f32 %v891, %v1440
    %v1505 = vmul.f32 %v893, %v1441
    %v1506 = vmul.f32 %v895, %v1442
    %v1507 = vmul.f32 %v897, %v1443
    %v1508 = vmul.f32 %v899, %v1444
    %v1509 = vmul.f32 %v901, %v1445
    %v1510 = vmul.f32 %v903, %v1446
    %v1511 = vmul.f32 %v905, %v1447
    %v1512 = vmul.f32 %v907, %v1448
    %v1513 = vmul.f32 %v909, %v1449
    %v1514 = vmul.f32 %v911, %v1450
    %v1515 = vmul.f32 %v913, %v1451
    %v1516 = vmul.f32 %v915, %v1452
    %v1517 = vmul.f32 %v917, %v1453
    %v1518 = vmul.f32 %v919, %v1454
    %v1519 = vmul.f32 %v921, %v1455
    %v1520 = vmul.f32 %v923, %v1456
    %v1521 = vmul.f32 %v925, %v1457
    %v1522 = vmul.f32 %v927, %v1458
    %v1523 = vmul.f32 %v929, %v1459
    %v1524 = vmul.f32 %v931, %v1460
    %v1525 = vmul.f32 %v933, %v1461
    %v1526 = vmul.f32 %v935, %v1462
    %v1527 = vmul.f32 %v937, %v1463
    %v1528 = vmul.f32 %v939, %v1464
    %v1529 = vmul.f32 %v941, %v1465
    %v1530 = vmul.f32 %v943, %v1466
    %v1531 = vmul.f32 %v945, %v1467
    %v1532 = vmul.f32 %v947, %v1468
    %v1533 = vmul.f32 %v949, %v1469
    %v1534 = vmul.f32 %v951, %v1470
    %v1535 = vmul.f32 %v953, %v1471
    %v1536 = vmul.f32 %v955, %v1472
    %v1537 = vmul.f32 %v957, %v1473
    %v1538 = vmul.f32 %v959, %v1474
    %v1539 = vmul.f32 %v961, %v1475
    %v1540 = vmul.f32 %v963, %v1476
    %v1541 = vmul.f32 %v965, %v1477
    %v1542 = vsub.f32 0.0, %v646
    %v1543 = vsub.f32 0.0, %v647
    %v1544 = vsub.f32 0.0, %v648
    %v1545 = vsub.f32 0.0, %v649
    %v1546 = vsub.f32 0.0, %v650
    %v1547 = vsub.f32 0.0, %v651
    %v1548 = vsub.f32 0.0, %v652
    %v1549 = vsub.f32 0.0, %v653
    %v1550 = vsub.f32 0.0, %v654
    %v1551 = vsub.f32 0.0, %v655
    %v1552 = vsub.f32 0.0, %v656
    %v1553 = vsub.f32 0.0, %v657
    %v1554 = vsub.f32 0.0, %v658
    %v1555 = vsub.f32 0.0, %v659
    %v1556 = vsub.f32 0.0, %v660
    %v1557 = vsub.f32 0.0, %v661
    %v1558 = vsub.f32 0.0, %v662
    %v1559 = vsub.f32 0.0, %v663
    %v1560 = vsub.f32 0.0, %v664
    %v1561 = vsub.f32 0.0, %v665
    %v1562 = vsub.f32 0.0, %v666
    %v1563 = vsub.f32 0.0, %v667
    %v1564 = vsub.f32 0.0, %v668
    %v1565 = vsub.f32 0.0, %v669
    %v1566 = vsub.f32 0.0, %v670
    %v1567 = vsub.f32 0.0, %v671
    %v1568 = vsub.f32 0.0, %v672
    %v1569 = vsub.f32 0.0, %v673
    %v1570 = vsub.f32 0.0, %v674
    %v1571 = vsub.f32 0.0, %v675
    %v1572 = vsub.f32 0.0, %v676
    %v1573 = vsub.f32 0.0, %v677
    %v1574 = vsub.f32 0.0, %v678
    %v1575 = vsub.f32 0.0, %v679
    %v1576 = vsub.f32 0.0, %v680
    %v1577 = vsub.f32 0.0, %v681
    %v1578 = vsub.f32 0.0, %v682
    %v1579 = vsub.f32 0.0, %v683
    %v1580 = vsub.f32 0.0, %v684
    %v1581 = vsub.f32 0.0, %v685
    %v1582 = vsub.f32 0.0, %v686
    %v1583 = vsub.f32 0.0, %v687
    %v1584 = vsub.f32 0.0, %v688
    %v1585 = vsub.f32 0.0, %v689
    %v1586 = vsub.f32 0.0, %v690
    %v1587 = vsub.f32 0.0, %v691
    %v1588 = vsub.f32 0.0, %v692
    %v1589 = vsub.f32 0.0, %v693
    %v1590 = vsub.f32 0.0, %v694
    %v1591 = vsub.f32 0.0, %v695
    %v1592 = vsub.f32 0.0, %v696
    %v1593 = vsub.f32 0.0, %v697
    %v1594 = vsub.f32 0.0, %v698
    %v1595 = vsub.f32 0.0, %v699
    %v1596 = vsub.f32 0.0, %v700
    %v1597 = vsub.f32 0.0, %v701
    %v1598 = vsub.f32 0.0, %v702
    %v1599 = vsub.f32 0.0, %v703
    %v1600 = vsub.f32 0.0, %v704
    %v1601 = vsub.f32 0.0, %v705
    %v1602 = vsub.f32 0.0, %v706
    %v1603 = vsub.f32 0.0, %v707
    %v1604 = vsub.f32 0.0, %v708
    %v1605 = vsub.f32 0.0, %v709
    %v1606 = vmul.f32 %v1542, %v646
    %v1607 = vmul.f32 %v1543, %v647
    %v1608 = vmul.f32 %v1544, %v648
    %v1609 = vmul.f32 %v1545, %v649
    %v1610 = vmul.f32 %v1546, %v650
    %v1611 = vmul.f32 %v1547, %v651
    %v1612 = vmul.f32 %v1548, %v652
    %v1613 = vmul.f32 %v1549, %v653
    %v1614 = vmul.f32 %v1550, %v654
    %v1615 = vmul.f32 %v1551, %v655
    %v1616 = vmul.f32 %v1552, %v656
    %v1617 = vmul.f32 %v1553, %v657
    %v1618 = vmul.f32 %v1554, %v658
    %v1619 = vmul.f32 %v1555, %v659
    %v1620 = vmul.f32 %v1556, %v660
    %v1621 = vmul.f32 %v1557, %v661
    %v1622 = vmul.f32 %v1558, %v662
    %v1623 = vmul.f32 %v1559, %v663
    %v1624 = vmul.f32 %v1560, %v664
    %v1625 = vmul.f32 %v1561, %v665
    %v1626 = vmul.f32 %v1562, %v666
    %v1627 = vmul.f32 %v1563, %v667
    %v1628 = vmul.f32 %v1564, %v668
    %v1629 = vmul.f32 %v1565, %v669
    %v1630 = vmul.f32 %v1566, %v670
    %v1631 = vmul.f32 %v1567, %v671
    %v1632 = vmul.f32 %v1568, %v672
    %v1633 = vmul.f32 %v1569, %v673
    %v1634 = vmul.f32 %v1570, %v674
    %v1635 = vmul.f32 %v1571, %v675
    %v1636 = vmul.f32 %v1572, %v676
    %v1637 = vmul.f32 %v1573, %v677
    %v1638 = vmul.f32 %v1574, %v678
    %v1639 = vmul.f32 %v1575, %v679
    %v1640 = vmul.f32 %v1576, %v680
    %v1641 = vmul.f32 %v1577, %v681
    %v1642 = vmul.f32 %v1578, %v682
    %v1643 = vmul.f32 %v1579, %v683
    %v1644 = vmul.f32 %v1580, %v684
    %v1645 = vmul.f32 %v1581, %v685
    %v1646 = vmul.f32 %v1582, %v686
    %v1647 = vmul.f32 %v1583, %v687
    %v1648 = vmul.f32 %v1584, %v688
    %v1649 = vmul.f32 %v1585, %v689
    %v1650 = vmul.f32 %v1586, %v690
    %v1651 = vmul.f32 %v1587, %v691
    %v1652 = vmul.f32 %v1588, %v692
    %v1653 = vmul.f32 %v1589, %v693
    %v1654 = vmul.f32 %v1590, %v694
    %v1655 = vmul.f32 %v1591, %v695
    %v1656 = vmul.f32 %v1592, %v696
    %v1657 = vmul.f32 %v1593, %v697
    %v1658 = vmul.f32 %v1594, %v698
    %v1659 = vmul.f32 %v1595, %v699
    %v1660 = vmul.f32 %v1596, %v700
    %v1661 = vmul.f32 %v1597, %v701
    %v1662 = vmul.f32 %v1598, %v702
    %v1663 = vmul.f32 %v1599, %v703
    %v1664 = vmul.f32 %v1600, %v704
    %v1665 = vmul.f32 %v1601, %v705
    %v1666 = vmul.f32 %v1602, %v706
    %v1667 = vmul.f32 %v1603, %v707
    %v1668 = vmul.f32 %v1604, %v708
    %v1669 = vmul.f32 %v1605, %v709
    %v1670 = vmul.f32 %v1606, 1.442695
    %v1671 = vpow.pop %v1670
    %v1672 = vmul.f32 %v1607, 1.442695
    %v1673 = vpow.pop %v1672
    %v1674 = vmul.f32 %v1608, 1.442695
    %v1675 = vpow.pop %v1674
    %v1676 = vmul.f32 %v1609, 1.442695
    %v1677 = vpow.pop %v1676
    %v1678 = vmul.f32 %v1610, 1.442695
    %v1679 = vpow.pop %v1678
    %v1680 = vmul.f32 %v1611, 1.442695
    %v1681 = vpow.pop %v1680
    %v1682 = vmul.f32 %v1612, 1.442695
    %v1683 = vpow.pop %v1682
    %v1684 = vmul.f32 %v1613, 1.442695
    %v1685 = vpow.pop %v1684
    %v1686 = vmul.f32 %v1614, 1.442695
    %v1687 = vpow.pop %v1686
    %v1688 = vmul.f32 %v1615, 1.442695
    %v1689 = vpow.pop %v1688
    %v1690 = vmul.f32 %v1616, 1.442695
    %v1691 = vpow.pop %v1690
    %v1692 = vmul.f32 %v1617, 1.442695
    %v1693 = vpow.pop %v1692
    %v1694 = vmul.f32 %v1618, 1.442695
    %v1695 = vpow.pop %v1694
    %v1696 = vmul.f32 %v1619, 1.442695
    %v1697 = vpow.pop %v1696
    %v1698 = vmul.f32 %v1620, 1.442695
    %v1699 = vpow.pop %v1698
    %v1700 = vmul.f32 %v1621, 1.442695
    %v1701 = vpow.pop %v1700
    %v1702 = vmul.f32 %v1622, 1.442695
    %v1703 = vpow.pop %v1702
    %v1704 = vmul.f32 %v1623, 1.442695
    %v1705 = vpow.pop %v1704
    %v1706 = vmul.f32 %v1624, 1.442695
    %v1707 = vpow.pop %v1706
    %v1708 = vmul.f32 %v1625, 1.442695
    %v1709 = vpow.pop %v1708
    %v1710 = vmul.f32 %v1626, 1.442695
    %v1711 = vpow.pop %v1710
    %v1712 = vmul.f32 %v1627, 1.442695
    %v1713 = vpow.pop %v1712
    %v1714 = vmul.f32 %v1628, 1.442695
    %v1715 = vpow.pop %v1714
    %v1716 = vmul.f32 %v1629, 1.442695
    %v1717 = vpow.pop %v1716
    %v1718 = vmul.f32 %v1630, 1.442695
    %v1719 = vpow.pop %v1718
    %v1720 = vmul.f32 %v1631, 1.442695
    %v1721 = vpow.pop %v1720
    %v1722 = vmul.f32 %v1632, 1.442695
    %v1723 = vpow.pop %v1722
    %v1724 = vmul.f32 %v1633, 1.442695
    %v1725 = vpow.pop %v1724
    %v1726 = vmul.f32 %v1634, 1.442695
    %v1727 = vpow.pop %v1726
    %v1728 = vmul.f32 %v1635, 1.442695
    %v1729 = vpow.pop %v1728
    %v1730 = vmul.f32 %v1636, 1.442695
    %v1731 = vpow.pop %v1730
    %v1732 = vmul.f32 %v1637, 1.442695
    %v1733 = vpow.pop %v1732
    %v1734 = vmul.f32 %v1638, 1.442695
    %v1735 = vpow.pop %v1734
    %v1736 = vmul.f32 %v1639, 1.442695
    %v1737 = vpow.pop %v1736
    %v1738 = vmul.f32 %v1640, 1.442695
    %v1739 = vpow.pop %v1738
    %v1740 = vmul.f32 %v1641, 1.442695
    %v1741 = vpow.pop %v1740
    %v1742 = vmul.f32 %v1642, 1.442695
    %v1743 = vpow.pop %v1742
    %v1744 = vmul.f32 %v1643, 1.442695
    %v1745 = vpow.pop %v1744
    %v1746 = vmul.f32 %v1644, 1.442695
    %v1747 = vpow.pop %v1746
    %v1748 = vmul.f32 %v1645, 1.442695
    %v1749 = vpow.pop %v1748
    %v1750 = vmul.f32 %v1646, 1.442695
    %v1751 = vpow.pop %v1750
    %v1752 = vmul.f32 %v1647, 1.442695
    %v1753 = vpow.pop %v1752
    %v1754 = vmul.f32 %v1648, 1.442695
    %v1755 = vpow.pop %v1754
    %v1756 = vmul.f32 %v1649, 1.442695
    %v1757 = vpow.pop %v1756
    %v1758 = vmul.f32 %v1650, 1.442695
    %v1759 = vpow.pop %v1758
    %v1760 = vmul.f32 %v1651, 1.442695
    %v1761 = vpow.pop %v1760
    %v1762 = vmul.f32 %v1652, 1.442695
    %v1763 = vpow.pop %v1762
    %v1764 = vmul.f32 %v1653, 1.442695
    %v1765 = vpow.pop %v1764
    %v1766 = vmul.f32 %v1654, 1.442695
    %v1767 = vpow.pop %v1766
    %v1768 = vmul.f32 %v1655, 1.442695
    %v1769 = vpow.pop %v1768
    %v1770 = vmul.f32 %v1656, 1.442695
    %v1771 = vpow.pop %v1770
    %v1772 = vmul.f32 %v1657, 1.442695
    %v1773 = vpow.pop %v1772
    %v1774 = vmul.f32 %v1658, 1.442695
    %v1775 = vpow.pop %v1774
    %v1776 = vmul.f32 %v1659, 1.442695
    %v1777 = vpow.pop %v1776
    %v1778 = vmul.f32 %v1660, 1.442695
    %v1779 = vpow.pop %v1778
    %v1780 = vmul.f32 %v1661, 1.442695
    %v1781 = vpow.pop %v1780
    %v1782 = vmul.f32 %v1662, 1.442695
    %v1783 = vpow.pop %v1782
    %v1784 = vmul.f32 %v1663, 1.442695
    %v1785 = vpow.pop %v1784
    %v1786 = vmul.f32 %v1664, 1.442695
    %v1787 = vpow.pop %v1786
    %v1788 = vmul.f32 %v1665, 1.442695
    %v1789 = vpow.pop %v1788
    %v1790 = vmul.f32 %v1666, 1.442695
    %v1791 = vpow.pop %v1790
    %v1792 = vmul.f32 %v1667, 1.442695
    %v1793 = vpow.pop %v1792
    %v1794 = vmul.f32 %v1668, 1.442695
    %v1795 = vpow.pop %v1794
    %v1796 = vmul.f32 %v1669, 1.442695
    %v1797 = vpow.pop %v1796
    %v1798 = vmul.f32 %v1478, %v1671
    %v1799 = vmul.f32 %v1479, %v1673
    %v1800 = vmul.f32 %v1480, %v1675
    %v1801 = vmul.f32 %v1481, %v1677
    %v1802 = vmul.f32 %v1482, %v1679
    %v1803 = vmul.f32 %v1483, %v1681
    %v1804 = vmul.f32 %v1484, %v1683
    %v1805 = vmul.f32 %v1485, %v1685
    %v1806 = vmul.f32 %v1486, %v1687
    %v1807 = vmul.f32 %v1487, %v1689
    %v1808 = vmul.f32 %v1488, %v1691
    %v1809 = vmul.f32 %v1489, %v1693
    %v1810 = vmul.f32 %v1490, %v1695
    %v1811 = vmul.f32 %v1491, %v1697
    %v1812 = vmul.f32 %v1492, %v1699
    %v1813 = vmul.f32 %v1493, %v1701
    %v1814 = vmul.f32 %v1494, %v1703
    %v1815 = vmul.f32 %v1495, %v1705
    %v1816 = vmul.f32 %v1496, %v1707
    %v1817 = vmul.f32 %v1497, %v1709
    %v1818 = vmul.f32 %v1498, %v1711
    %v1819 = vmul.f32 %v1499, %v1713
    %v1820 = vmul.f32 %v1500, %v1715
    %v1821 = vmul.f32 %v1501, %v1717
    %v1822 = vmul.f32 %v1502, %v1719
    %v1823 = vmul.f32 %v1503, %v1721
    %v1824 = vmul.f32 %v1504, %v1723
    %v1825 = vmul.f32 %v1505, %v1725
    %v1826 = vmul.f32 %v1506, %v1727
    %v1827 = vmul.f32 %v1507, %v1729
    %v1828 = vmul.f32 %v1508, %v1731
    %v1829 = vmul.f32 %v1509, %v1733
    %v1830 = vmul.f32 %v1510, %v1735
    %v1831 = vmul.f32 %v1511, %v1737
    %v1832 = vmul.f32 %v1512, %v1739
    %v1833 = vmul.f32 %v1513, %v1741
    %v1834 = vmul.f32 %v1514, %v1743
    %v1835 = vmul.f32 %v1515, %v1745
    %v1836 = vmul.f32 %v1516, %v1747
    %v1837 = vmul.f32 %v1517, %v1749
    %v1838 = vmul.f32 %v1518, %v1751
    %v1839 = vmul.f32 %v1519, %v1753
    %v1840 = vmul.f32 %v1520, %v1755
    %v1841 = vmul.f32 %v1521, %v1757
    %v1842 = vmul.f32 %v1522, %v1759
    %v1843 = vmul.f32 %v1523, %v1761
    %v1844 = vmul.f32 %v1524, %v1763
    %v1845 = vmul.f32 %v1525, %v1765
    %v1846 = vmul.f32 %v1526, %v1767
    %v1847 = vmul.f32 %v1527, %v1769
    %v1848 = vmul.f32 %v1528, %v1771
    %v1849 = vmul.f32 %v1529, %v1773
    %v1850 = vmul.f32 %v1530, %v1775
    %v1851 = vmul.f32 %v1531, %v1777
    %v1852 = vmul.f32 %v1532, %v1779
    %v1853 = vmul.f32 %v1533, %v1781
    %v1854 = vmul.f32 %v1534, %v1783
    %v1855 = vmul.f32 %v1535, %v1785
    %v1856 = vmul.f32 %v1536, %v1787
    %v1857 = vmul.f32 %v1537, %v1789
    %v1858 = vmul.f32 %v1538, %v1791
    %v1859 = vmul.f32 %v1539, %v1793
    %v1860 = vmul.f32 %v1540, %v1795
    %v1861 = vmul.f32 %v1541, %v1797
    %v1862 = vsub.f32 1.0, %v1798
    %v1863 = vsub.f32 1.0, %v1799
    %v1864 = vsub.f32 1.0, %v1800
    %v1865 = vsub.f32 1.0, %v1801
    %v1866 = vsub.f32 1.0, %v1802
    %v1867 = vsub.f32 1.0, %v1803
    %v1868 = vsub.f32 1.0, %v1804
    %v1869 = vsub.f32 1.0, %v1805
    %v1870 = vsub.f32 1.0, %v1806
    %v1871 = vsub.f32 1.0, %v1807
    %v1872 = vsub.f32 1.0, %v1808
    %v1873 = vsub.f32 1.0, %v1809
    %v1874 = vsub.f32 1.0, %v1810
    %v1875 = vsub.f32 1.0, %v1811
    %v1876 = vsub.f32 1.0, %v1812
    %v1877 = vsub.f32 1.0, %v1813
    %v1878 = vsub.f32 1.0, %v1814
    %v1879 = vsub.f32 1.0, %v1815
    %v1880 = vsub.f32 1.0, %v1816
    %v1881 = vsub.f32 1.0, %v1817
    %v1882 = vsub.f32 1.0, %v1818
    %v1883 = vsub.f32 1.0, %v1819
    %v1884 = vsub.f32 1.0, %v1820
    %v1885 = vsub.f32 1.0, %v1821
    %v1886 = vsub.f32 1.0, %v1822
    %v1887 = vsub.f32 1.0, %v1823
    %v1888 = vsub.f32 1.0, %v1824
    %v1889 = vsub.f32 1.0, %v1825
    %v1890 = vsub.f32 1.0, %v1826
    %v1891 = vsub.f32 1.0, %v1827
    %v1892 = vsub.f32 1.0, %v1828
    %v1893 = vsub.f32 1.0, %v1829
    %v1894 = vsub.f32 1.0, %v1830
    %v1895 = vsub.f32 1.0, %v1831
    %v1896 = vsub.f32 1.0, %v1832
    %v1897 = vsub.f32 1.0, %v1833
    %v1898 = vsub.f32 1.0, %v1834
    %v1899 = vsub.f32 1.0, %v1835
    %v1900 = vsub.f32 1.0, %v1836
    %v1901 = vsub.f32 1.0, %v1837
    %v1902 = vsub.f32 1.0, %v1838
    %v1903 = vsub.f32 1.0, %v1839
    %v1904 = vsub.f32 1.0, %v1840
    %v1905 = vsub.f32 1.0, %v1841
    %v1906 = vsub.f32 1.0, %v1842
    %v1907 = vsub.f32 1.0, %v1843
    %v1908 = vsub.f32 1.0, %v1844
    %v1909 = vsub.f32 1.0, %v1845
    %v1910 = vsub.f32 1.0, %v1846
    %v1911 = vsub.f32 1.0, %v1847
    %v1912 = vsub.f32 1.0, %v1848
    %v1913 = vsub.f32 1.0, %v1849
    %v1914 = vsub.f32 1.0, %v1850
    %v1915 = vsub.f32 1.0, %v1851
    %v1916 = vsub.f32 1.0, %v1852
    %v1917 = vsub.f32 1.0, %v1853
    %v1918 = vsub.f32 1.0, %v1854
    %v1919 = vsub.f32 1.0, %v1855
    %v1920 = vsub.f32 1.0, %v1856
    %v1921 = vsub.f32 1.0, %v1857
    %v1922 = vsub.f32 1.0, %v1858
    %v1923 = vsub.f32 1.0, %v1859
    %v1924 = vsub.f32 1.0, %v1860
    %v1925 = vsub.f32 1.0, %v1861
    %vm1926 = vcmp.ge.f32.partialorder %v582, 0.0
    %vm1927 = vcmp.ge.f32.partialorder %v583, 0.0
    %vm1928 = vcmp.ge.f32.partialorder %v584, 0.0
    %vm1929 = vcmp.ge.f32.partialorder %v585, 0.0
    %vm1930 = vcmp.ge.f32.partialorder %v586, 0.0
    %vm1931 = vcmp.ge.f32.partialorder %v587, 0.0
    %vm1932 = vcmp.ge.f32.partialorder %v588, 0.0
    %vm1933 = vcmp.ge.f32.partialorder %v589, 0.0
    %vm1934 = vcmp.ge.f32.partialorder %v590, 0.0
    %vm1935 = vcmp.ge.f32.partialorder %v591, 0.0
    %vm1936 = vcmp.ge.f32.partialorder %v592, 0.0
    %vm1937 = vcmp.ge.f32.partialorder %v593, 0.0
    %vm1938 = vcmp.ge.f32.partialorder %v594, 0.0
    %vm1939 = vcmp.ge.f32.partialorder %v595, 0.0
    %vm1940 = vcmp.ge.f32.partialorder %v596, 0.0
    %vm1941 = vcmp.ge.f32.partialorder %v597, 0.0
    %vm1942 = vcmp.ge.f32.partialorder %v598, 0.0
    %vm1943 = vcmp.ge.f32.partialorder %v599, 0.0
    %vm1944 = vcmp.ge.f32.partialorder %v600, 0.0
    %vm1945 = vcmp.ge.f32.partialorder %v601, 0.0
    %vm1946 = vcmp.ge.f32.partialorder %v602, 0.0
    %vm1947 = vcmp.ge.f32.partialorder %v603, 0.0
    %vm1948 = vcmp.ge.f32.partialorder %v604, 0.0
    %vm1949 = vcmp.ge.f32.partialorder %v605, 0.0
    %vm1950 = vcmp.ge.f32.partialorder %v606, 0.0
    %vm1951 = vcmp.ge.f32.partialorder %v607, 0.0
    %vm1952 = vcmp.ge.f32.partialorder %v608, 0.0
    %vm1953 = vcmp.ge.f32.partialorder %v609, 0.0
    %vm1954 = vcmp.ge.f32.partialorder %v610, 0.0
    %vm1955 = vcmp.ge.f32.partialorder %v611, 0.0
    %vm1956 = vcmp.ge.f32.partialorder %v612, 0.0
    %vm1957 = vcmp.ge.f32.partialorder %v613, 0.0
    %vm1958 = vcmp.ge.f32.partialorder %v614, 0.0
    %vm1959 = vcmp.ge.f32.partialorder %v615, 0.0
    %vm1960 = vcmp.ge.f32.partialorder %v616, 0.0
    %vm1961 = vcmp.ge.f32.partialorder %v617, 0.0
    %vm1962 = vcmp.ge.f32.partialorder %v618, 0.0
    %vm1963 = vcmp.ge.f32.partialorder %v619, 0.0
    %vm1964 = vcmp.ge.f32.partialorder %v620, 0.0
    %vm1965 = vcmp.ge.f32.partialorder %v621, 0.0
    %vm1966 = vcmp.ge.f32.partialorder %v622, 0.0
    %vm1967 = vcmp.ge.f32.partialorder %v623, 0.0
    %vm1968 = vcmp.ge.f32.partialorder %v624, 0.0
    %vm1969 = vcmp.ge.f32.partialorder %v625, 0.0
    %vm1970 = vcmp.ge.f32.partialorder %v626, 0.0
    %vm1971 = vcmp.ge.f32.partialorder %v627, 0.0
    %vm1972 = vcmp.ge.f32.partialorder %v628, 0.0
    %vm1973 = vcmp.ge.f32.partialorder %v629, 0.0
    %vm1974 = vcmp.ge.f32.partialorder %v630, 0.0
    %vm1975 = vcmp.ge.f32.partialorder %v631, 0.0
    %vm1976 = vcmp.ge.f32.partialorder %v632, 0.0
    %vm1977 = vcmp.ge.f32.partialorder %v633, 0.0
    %vm1978 = vcmp.ge.f32.partialorder %v634, 0.0
    %vm1979 = vcmp.ge.f32.partialorder %v635, 0.0
    %vm1980 = vcmp.ge.f32.partialorder %v636, 0.0
    %vm1981 = vcmp.ge.f32.partialorder %v637, 0.0
    %vm1982 = vcmp.ge.f32.partialorder %v638, 0.0
    %vm1983 = vcmp.ge.f32.partialorder %v639, 0.0
    %vm1984 = vcmp.ge.f32.partialorder %v640, 0.0
    %vm1985 = vcmp.ge.f32.partialorder %v641, 0.0
    %vm1986 = vcmp.ge.f32.partialorder %v642, 0.0
    %vm1987 = vcmp.ge.f32.partialorder %v643, 0.0
    %vm1988 = vcmp.ge.f32.partialorder %v644, 0.0
    %vm1989 = vcmp.ge.f32.partialorder %v645, 0.0
    %v1990 = vsub.f32 0.0, %v1862
    %v1991 = vsub.f32 0.0, %v1863
    %v1992 = vsub.f32 0.0, %v1864
    %v1993 = vsub.f32 0.0, %v1865
    %v1994 = vsub.f32 0.0, %v1866
    %v1995 = vsub.f32 0.0, %v1867
    %v1996 = vsub.f32 0.0, %v1868
    %v1997 = vsub.f32 0.0, %v1869
    %v1998 = vsub.f32 0.0, %v1870
    %v1999 = vsub.f32 0.0, %v1871
    %v2000 = vsub.f32 0.0, %v1872
    %v2001 = vsub.f32 0.0, %v1873
    %v2002 = vsub.f32 0.0, %v1874
    %v2003 = vsub.f32 0.0, %v1875
    %v2004 = vsub.f32 0.0, %v1876
    %v2005 = vsub.f32 0.0, %v1877
    %v2006 = vsub.f32 0.0, %v1878
    %v2007 = vsub.f32 0.0, %v1879
    %v2008 = vsub.f32 0.0, %v1880
    %v2009 = vsub.f32 0.0, %v1881
    %v2010 = vsub.f32 0.0, %v1882
    %v2011 = vsub.f32 0.0, %v1883
    %v2012 = vsub.f32 0.0, %v1884
    %v2013 = vsub.f32 0.0, %v1885
    %v2014 = vsub.f32 0.0, %v1886
    %v2015 = vsub.f32 0.0, %v1887
    %v2016 = vsub.f32 0.0, %v1888
    %v2017 = vsub.f32 0.0, %v1889
    %v2018 = vsub.f32 0.0, %v1890
    %v2019 = vsub.f32 0.0, %v1891
    %v2020 = vsub.f32 0.0, %v1892
    %v2021 = vsub.f32 0.0, %v1893
    %v2022 = vsub.f32 0.0, %v1894
    %v2023 = vsub.f32 0.0, %v1895
    %v2024 = vsub.f32 0.0, %v1896
    %v2025 = vsub.f32 0.0, %v1897
    %v2026 = vsub.f32 0.0, %v1898
    %v2027 = vsub.f32 0.0, %v1899
    %v2028 = vsub.f32 0.0, %v1900
    %v2029 = vsub.f32 0.0, %v1901
    %v2030 = vsub.f32 0.0, %v1902
    %v2031 = vsub.f32 0.0, %v1903
    %v2032 = vsub.f32 0.0, %v1904
    %v2033 = vsub.f32 0.0, %v1905
    %v2034 = vsub.f32 0.0, %v1906
    %v2035 = vsub.f32 0.0, %v1907
    %v2036 = vsub.f32 0.0, %v1908
    %v2037 = vsub.f32 0.0, %v1909
    %v2038 = vsub.f32 0.0, %v1910
    %v2039 = vsub.f32 0.0, %v1911
    %v2040 = vsub.f32 0.0, %v1912
    %v2041 = vsub.f32 0.0, %v1913
    %v2042 = vsub.f32 0.0, %v1914
    %v2043 = vsub.f32 0.0, %v1915
    %v2044 = vsub.f32 0.0, %v1916
    %v2045 = vsub.f32 0.0, %v1917
    %v2046 = vsub.f32 0.0, %v1918
    %v2047 = vsub.f32 0.0, %v1919
    %v2048 = vsub.f32 0.0, %v1920
    %v2049 = vsub.f32 0.0, %v1921
    %v2050 = vsub.f32 0.0, %v1922
    %v2051 = vsub.f32 0.0, %v1923
    %v2052 = vsub.f32 0.0, %v1924
    %v2053 = vsub.f32 0.0, %v1925
    %v2054 = vsel %vm1926, %v1862, %v1990
    %v2055 = vsel %vm1927, %v1863, %v1991
    %v2056 = vsel %vm1928, %v1864, %v1992
    %v2057 = vsel %vm1929, %v1865, %v1993
    %v2058 = vsel %vm1930, %v1866, %v1994
    %v2059 = vsel %vm1931, %v1867, %v1995
    %v2060 = vsel %vm1932, %v1868, %v1996
    %v2061 = vsel %vm1933, %v1869, %v1997
    %v2062 = vsel %vm1934, %v1870, %v1998
    %v2063 = vsel %vm1935, %v1871, %v1999
    %v2064 = vsel %vm1936, %v1872, %v2000
    %v2065 = vsel %vm1937, %v1873, %v2001
    %v2066 = vsel %vm1938, %v1874, %v2002
    %v2067 = vsel %vm1939, %v1875, %v2003
    %v2068 = vsel %vm1940, %v1876, %v2004
    %v2069 = vsel %vm1941, %v1877, %v2005
    %v2070 = vsel %vm1942, %v1878, %v2006
    %v2071 = vsel %vm1943, %v1879, %v2007
    %v2072 = vsel %vm1944, %v1880, %v2008
    %v2073 = vsel %vm1945, %v1881, %v2009
    %v2074 = vsel %vm1946, %v1882, %v2010
    %v2075 = vsel %vm1947, %v1883, %v2011
    %v2076 = vsel %vm1948, %v1884, %v2012
    %v2077 = vsel %vm1949, %v1885, %v2013
    %v2078 = vsel %vm1950, %v1886, %v2014
    %v2079 = vsel %vm1951, %v1887, %v2015
    %v2080 = vsel %vm1952, %v1888, %v2016
    %v2081 = vsel %vm1953, %v1889, %v2017
    %v2082 = vsel %vm1954, %v1890, %v2018
    %v2083 = vsel %vm1955, %v1891, %v2019
    %v2084 = vsel %vm1956, %v1892, %v2020
    %v2085 = vsel %vm1957, %v1893, %v2021
    %v2086 = vsel %vm1958, %v1894, %v2022
    %v2087 = vsel %vm1959, %v1895, %v2023
    %v2088 = vsel %vm1960, %v1896, %v2024
    %v2089 = vsel %vm1961, %v1897, %v2025
    %v2090 = vsel %vm1962, %v1898, %v2026
    %v2091 = vsel %vm1963, %v1899, %v2027
    %v2092 = vsel %vm1964, %v1900, %v2028
    %v2093 = vsel %vm1965, %v1901, %v2029
    %v2094 = vsel %vm1966, %v1902, %v2030
    %v2095 = vsel %vm1967, %v1903, %v2031
    %v2096 = vsel %vm1968, %v1904, %v2032
    %v2097 = vsel %vm1969, %v1905, %v2033
    %v2098 = vsel %vm1970, %v1906, %v2034
    %v2099 = vsel %vm1971, %v1907, %v2035
    %v2100 = vsel %vm1972, %v1908, %v2036
    %v2101 = vsel %vm1973, %v1909, %v2037
    %v2102 = vsel %vm1974, %v1910, %v2038
    %v2103 = vsel %vm1975, %v1911, %v2039
    %v2104 = vsel %vm1976, %v1912, %v2040
    %v2105 = vsel %vm1977, %v1913, %v2041
    %v2106 = vsel %vm1978, %v1914, %v2042
    %v2107 = vsel %vm1979, %v1915, %v2043
    %v2108 = vsel %vm1980, %v1916, %v2044
    %v2109 = vsel %vm1981, %v1917, %v2045
    %v2110 = vsel %vm1982, %v1918, %v2046
    %v2111 = vsel %vm1983, %v1919, %v2047
    %v2112 = vsel %vm1984, %v1920, %v2048
    %v2113 = vsel %vm1985, %v1921, %v2049
    %v2114 = vsel %vm1986, %v1922, %v2050
    %v2115 = vsel %vm1987, %v1923, %v2051
    %v2116 = vsel %vm1988, %v1924, %v2052
    %v2117 = vsel %vm1989, %v1925, %v2053
    %v2118 = vadd.f32 %v2054, 1.0
    %v2119 = vadd.f32 %v2055, 1.0
    %v2120 = vadd.f32 %v2056, 1.0
    %v2121 = vadd.f32 %v2057, 1.0
    %v2122 = vadd.f32 %v2058, 1.0
    %v2123 = vadd.f32 %v2059, 1.0
    %v2124 = vadd.f32 %v2060, 1.0
    %v2125 = vadd.f32 %v2061, 1.0
    %v2126 = vadd.f32 %v2062, 1.0
    %v2127 = vadd.f32 %v2063, 1.0
    %v2128 = vadd.f32 %v2064, 1.0
    %v2129 = vadd.f32 %v2065, 1.0
    %v2130 = vadd.f32 %v2066, 1.0
    %v2131 = vadd.f32 %v2067, 1.0
    %v2132 = vadd.f32 %v2068, 1.0
    %v2133 = vadd.f32 %v2069, 1.0
    %v2134 = vadd.f32 %v2070, 1.0
    %v2135 = vadd.f32 %v2071, 1.0
    %v2136 = vadd.f32 %v2072, 1.0
    %v2137 = vadd.f32 %v2073, 1.0
    %v2138 = vadd.f32 %v2074, 1.0
    %v2139 = vadd.f32 %v2075, 1.0
    %v2140 = vadd.f32 %v2076, 1.0
    %v2141 = vadd.f32 %v2077, 1.0
    %v2142 = vadd.f32 %v2078, 1.0
    %v2143 = vadd.f32 %v2079, 1.0
    %v2144 = vadd.f32 %v2080, 1.0
    %v2145 = vadd.f32 %v2081, 1.0
    %v2146 = vadd.f32 %v2082, 1.0
    %v2147 = vadd.f32 %v2083, 1.0
    %v2148 = vadd.f32 %v2084, 1.0
    %v2149 = vadd.f32 %v2085, 1.0
    %v2150 = vadd.f32 %v2086, 1.0
    %v2151 = vadd.f32 %v2087, 1.0
    %v2152 = vadd.f32 %v2088, 1.0
    %v2153 = vadd.f32 %v2089, 1.0
    %v2154 = vadd.f32 %v2090, 1.0
    %v2155 = vadd.f32 %v2091, 1.0
    %v2156 = vadd.f32 %v2092, 1.0
    %v2157 = vadd.f32 %v2093, 1.0
    %v2158 = vadd.f32 %v2094, 1.0
    %v2159 = vadd.f32 %v2095, 1.0
    %v2160 = vadd.f32 %v2096, 1.0
    %v2161 = vadd.f32 %v2097, 1.0
    %v2162 = vadd.f32 %v2098, 1.0
    %v2163 = vadd.f32 %v2099, 1.0
    %v2164 = vadd.f32 %v2100, 1.0
    %v2165 = vadd.f32 %v2101, 1.0
    %v2166 = vadd.f32 %v2102, 1.0
    %v2167 = vadd.f32 %v2103, 1.0
    %v2168 = vadd.f32 %v2104, 1.0
    %v2169 = vadd.f32 %v2105, 1.0
    %v2170 = vadd.f32 %v2106, 1.0
    %v2171 = vadd.f32 %v2107, 1.0
    %v2172 = vadd.f32 %v2108, 1.0
    %v2173 = vadd.f32 %v2109, 1.0
    %v2174 = vadd.f32 %v2110, 1.0
    %v2175 = vadd.f32 %v2111, 1.0
    %v2176 = vadd.f32 %v2112, 1.0
    %v2177 = vadd.f32 %v2113, 1.0
    %v2178 = vadd.f32 %v2114, 1.0
    %v2179 = vadd.f32 %v2115, 1.0
    %v2180 = vadd.f32 %v2116, 1.0
    %v2181 = vadd.f32 %v2117, 1.0
    %v2182 = vmul.f32 %v518, %v2118
    %v2183 = vmul.f32 %v519, %v2119
    %v2184 = vmul.f32 %v520, %v2120
    %v2185 = vmul.f32 %v521, %v2121
    %v2186 = vmul.f32 %v522, %v2122
    %v2187 = vmul.f32 %v523, %v2123
    %v2188 = vmul.f32 %v524, %v2124
    %v2189 = vmul.f32 %v525, %v2125
    %v2190 = vmul.f32 %v526, %v2126
    %v2191 = vmul.f32 %v527, %v2127
    %v2192 = vmul.f32 %v528, %v2128
    %v2193 = vmul.f32 %v529, %v2129
    %v2194 = vmul.f32 %v530, %v2130
    %v2195 = vmul.f32 %v531, %v2131
    %v2196 = vmul.f32 %v532, %v2132
    %v2197 = vmul.f32 %v533, %v2133
    %v2198 = vmul.f32 %v534, %v2134
    %v2199 = vmul.f32 %v535, %v2135
    %v2200 = vmul.f32 %v536, %v2136
    %v2201 = vmul.f32 %v537, %v2137
    %v2202 = vmul.f32 %v538, %v2138
    %v2203 = vmul.f32 %v539, %v2139
    %v2204 = vmul.f32 %v540, %v2140
    %v2205 = vmul.f32 %v541, %v2141
    %v2206 = vmul.f32 %v542, %v2142
    %v2207 = vmul.f32 %v543, %v2143
    %v2208 = vmul.f32 %v544, %v2144
    %v2209 = vmul.f32 %v545, %v2145
    %v2210 = vmul.f32 %v546, %v2146
    %v2211 = vmul.f32 %v547, %v2147
    %v2212 = vmul.f32 %v548, %v2148
    %v2213 = vmul.f32 %v549, %v2149
    %v2214 = vmul.f32 %v550, %v2150
    %v2215 = vmul.f32 %v551, %v2151
    %v2216 = vmul.f32 %v552, %v2152
    %v2217 = vmul.f32 %v553, %v2153
    %v2218 = vmul.f32 %v554, %v2154
    %v2219 = vmul.f32 %v555, %v2155
    %v2220 = vmul.f32 %v556, %v2156
    %v2221 = vmul.f32 %v557, %v2157
    %v2222 = vmul.f32 %v558, %v2158
    %v2223 = vmul.f32 %v559, %v2159
    %v2224 = vmul.f32 %v560, %v2160
    %v2225 = vmul.f32 %v561, %v2161
    %v2226 = vmul.f32 %v562, %v2162
    %v2227 = vmul.f32 %v563, %v2163
    %v2228 = vmul.f32 %v564, %v2164
    %v2229 = vmul.f32 %v565, %v2165
    %v2230 = vmul.f32 %v566, %v2166
    %v2231 = vmul.f32 %v567, %v2167
    %v2232 = vmul.f32 %v568, %v2168
    %v2233 = vmul.f32 %v569, %v2169
    %v2234 = vmul.f32 %v570, %v2170
    %v2235 = vmul.f32 %v571, %v2171
    %v2236 = vmul.f32 %v572, %v2172
    %v2237 = vmul.f32 %v573, %v2173
    %v2238 = vmul.f32 %v574, %v2174
    %v2239 = vmul.f32 %v575, %v2175
    %v2240 = vmul.f32 %v576, %v2176
    %v2241 = vmul.f32 %v577, %v2177
    %v2242 = vmul.f32 %v578, %v2178
    %v2243 = vmul.f32 %v579, %v2179
    %v2244 = vmul.f32 %v580, %v2180
    %v2245 = vmul.f32 %v581, %v2181
    %v2246 = vld [vmem:[#allocation2] sm:$0xff]
    %v2247 = vld [vmem:[#allocation2 + $0x8] sm:$0xff]
    %v2248 = vld [vmem:[#allocation2 + $0x10] sm:$0xff]
    %v2249 = vld [vmem:[#allocation2 + $0x18] sm:$0xff]
    %v2250 = vld [vmem:[#allocation2 + $0x20] sm:$0xff]
    %v2251 = vld [vmem:[#allocation2 + $0x28] sm:$0xff]
    %v2252 = vld [vmem:[#allocation2 + $0x30] sm:$0xff]
    %v2253 = vld [vmem:[#allocation2 + $0x38] sm:$0xff]
    %v2254 = vld [vmem:[#allocation2 + $0x40] sm:$0xff]
    %v2255 = vld [vmem:[#allocation2 + $0x48] sm:$0xff]
    %v2256 = vld [vmem:[#allocation2 + $0x50] sm:$0xff]
    %v2257 = vld [vmem:[#allocation2 + $0x58] sm:$0xff]
    %v2258 = vld [vmem:[#allocation2 + $0x60] sm:$0xff]
    %v2259 = vld [vmem:[#allocation2 + $0x68] sm:$0xff]
    %v2260 = vld [vmem:[#allocation2 + $0x70] sm:$0xff]
    %v2261 = vld [vmem:[#allocation2 + $0x78] sm:$0xff]
    %v2262 = vld [vmem:[#allocation9] sm:$0xff]
    %v2263 = vld [vmem:[#allocation9 + $0x8] sm:$0xff]
    %v2264 = vld [vmem:[#allocation9 + $0x10] sm:$0xff]
    %v2265 = vld [vmem:[#allocation9 + $0x18] sm:$0xff]
    %v2266 = vld [vmem:[#allocation9 + $0x20] sm:$0xff]
    %v2267 = vld [vmem:[#allocation9 + $0x28] sm:$0xff]
    %v2268 = vld [vmem:[#allocation9 + $0x30] sm:$0xff]
    %v2269 = vld [vmem:[#allocation9 + $0x38] sm:$0xff]
    %v2270 = vld [vmem:[#allocation9 + $0x40] sm:$0xff]
    %v2271 = vld [vmem:[#allocation9 + $0x48] sm:$0xff]
    %v2272 = vld [vmem:[#allocation9 + $0x50] sm:$0xff]
    %v2273 = vld [vmem:[#allocation9 + $0x58] sm:$0xff]
    %v2274 = vld [vmem:[#allocation9 + $0x60] sm:$0xff]
    %v2275 = vld [vmem:[#allocation9 + $0x68] sm:$0xff]
    %v2276 = vld [vmem:[#allocation9 + $0x70] sm:$0xff]
    %v2277 = vld [vmem:[#allocation9 + $0x78] sm:$0xff]
    %v2278 = vld [vmem:[#allocation9 + $0x80] sm:$0xff]
    %v2279 = vld [vmem:[#allocation9 + $0x88] sm:$0xff]
    %v2280 = vld [vmem:[#allocation9 + $0x90] sm:$0xff]
    %v2281 = vld [vmem:[#allocation9 + $0x98] sm:$0xff]
    %v2282 = vld [vmem:[#allocation9 + $0xa0] sm:$0xff]
    %v2283 = vld [vmem:[#allocation9 + $0xa8] sm:$0xff]
    %v2284 = vld [vmem:[#allocation9 + $0xb0] sm:$0xff]
    %v2285 = vld [vmem:[#allocation9 + $0xb8] sm:$0xff]
    %v2286 = vld [vmem:[#allocation9 + $0xc0] sm:$0xff]
    %v2287 = vld [vmem:[#allocation9 + $0xc8] sm:$0xff]
    %v2288 = vld [vmem:[#allocation9 + $0xd0] sm:$0xff]
    %v2289 = vld [vmem:[#allocation9 + $0xd8] sm:$0xff]
    %v2290 = vld [vmem:[#allocation9 + $0xe0] sm:$0xff]
    %v2291 = vld [vmem:[#allocation9 + $0xe8] sm:$0xff]
    %v2292 = vld [vmem:[#allocation9 + $0xf0] sm:$0xff]
    %v2293 = vld [vmem:[#allocation9 + $0xf8] sm:$0xff]
    %v2294 = vld [vmem:[#allocation9 + $0x100] sm:$0xff]
    %v2295 = vld [vmem:[#allocation9 + $0x108] sm:$0xff]
    %v2296 = vld [vmem:[#allocation9 + $0x110] sm:$0xff]
    %v2297 = vld [vmem:[#allocation9 + $0x118] sm:$0xff]
    %v2298 = vld [vmem:[#allocation9 + $0x120] sm:$0xff]
    %v2299 = vld [vmem:[#allocation9 + $0x128] sm:$0xff]
    %v2300 = vld [vmem:[#allocation9 + $0x130] sm:$0xff]
    %v2301 = vld [vmem:[#allocation9 + $0x138] sm:$0xff]
    %v2302 = vld [vmem:[#allocation9 + $0x140] sm:$0xff]
    %v2303 = vld [vmem:[#allocation9 + $0x148] sm:$0xff]
    %v2304 = vld [vmem:[#allocation9 + $0x150] sm:$0xff]
    %v2305 = vld [vmem:[#allocation9 + $0x158] sm:$0xff]
    %v2306 = vld [vmem:[#allocation9 + $0x160] sm:$0xff]
    %v2307 = vld [vmem:[#allocation9 + $0x168] sm:$0xff]
    %v2308 = vld [vmem:[#allocation9 + $0x170] sm:$0xff]
    %v2309 = vld [vmem:[#allocation9 + $0x178] sm:$0xff]
    %v2310 = vld [vmem:[#allocation9 + $0x180] sm:$0xff]
    %v2311 = vld [vmem:[#allocation9 + $0x188] sm:$0xff]
    %v2312 = vld [vmem:[#allocation9 + $0x190] sm:$0xff]
    %v2313 = vld [vmem:[#allocation9 + $0x198] sm:$0xff]
    %v2314 = vld [vmem:[#allocation9 + $0x1a0] sm:$0xff]
    %v2315 = vld [vmem:[#allocation9 + $0x1a8] sm:$0xff]
    %v2316 = vld [vmem:[#allocation9 + $0x1b0] sm:$0xff]
    %v2317 = vld [vmem:[#allocation9 + $0x1b8] sm:$0xff]
    %v2318 = vld [vmem:[#allocation9 + $0x1c0] sm:$0xff]
    %v2319 = vld [vmem:[#allocation9 + $0x1c8] sm:$0xff]
    %v2320 = vld [vmem:[#allocation9 + $0x1d0] sm:$0xff]
    %v2321 = vld [vmem:[#allocation9 + $0x1d8] sm:$0xff]
    %v2322 = vld [vmem:[#allocation9 + $0x1e0] sm:$0xff]
    %v2323 = vld [vmem:[#allocation9 + $0x1e8] sm:$0xff]
    %v2324 = vld [vmem:[#allocation9 + $0x1f0] sm:$0xff]
    %v2325 = vld [vmem:[#allocation9 + $0x1f8] sm:$0xff]
    %2326 = vmatprep.subr.mxu0 0.0
    %2327 = vmatpush1.msra.mxu0 %v2277
    %2328 = vmatprep.subr.mxu0 0.0
    %2329 = vmatpush1.msra.mxu0 %v2276
    %2330 = vmatprep.subr.mxu0 0.0
    %2331 = vmatpush1.msra.mxu0 %v2275
    %2332 = vmatprep.subr.mxu0 0.0
    %2333 = vmatpush1.msra.mxu0 %v2274
    %2334 = vmatprep.subr.mxu0 0.0
    %2335 = vmatpush1.msra.mxu0 %v2273
    %2336 = vmatprep.subr.mxu0 0.0
    %2337 = vmatpush1.msra.mxu0 %v2272
    %2338 = vmatprep.subr.mxu0 0.0
    %2339 = vmatpush1.msra.mxu0 %v2271
    %2340 = vmatprep.subr.mxu0 0.0
    %2341 = vmatpush1.msra.mxu0 %v2270
    %2342 = vmatprep.subr.mxu0 0.0
    %2343 = vmatpush1.msra.mxu0 %v2269
    %2344 = vmatprep.subr.mxu0 0.0
    %2345 = vmatpush1.msra.mxu0 %v2268
    %2346 = vmatprep.subr.mxu0 0.0
    %2347 = vmatpush1.msra.mxu0 %v2267
    %2348 = vmatprep.subr.mxu0 0.0
    %2349 = vmatpush1.msra.mxu0 %v2266
    %2350 = vmatprep.subr.mxu0 0.0
    %2351 = vmatpush1.msra.mxu0 %v2265
    %2352 = vmatprep.subr.mxu0 0.0
    %2353 = vmatpush1.msra.mxu0 %v2264
    %2354 = vmatprep.subr.mxu0 0.0
    %2355 = vmatpush1.msra.mxu0 %v2263
    %2356 = vmatprep.subr.mxu0 0.0
    %2357 = vmatpush1.msra.mxu0 %v2262
    %2358 = vmatprep.subr.mxu0 0.0
    %2359 = vmatpush2.msra.mxu0 %v2293
    %2360 = vmatprep.subr.mxu0 0.0
    %2361 = vmatpush2.msra.mxu0 %v2292
    %2362 = vmatprep.subr.mxu0 0.0
    %2363 = vmatpush2.msra.mxu0 %v2291
    %2364 = vmatprep.subr.mxu0 0.0
    %2365 = vmatpush2.msra.mxu0 %v2290
    %2366 = vmatprep.subr.mxu0 0.0
    %2367 = vmatpush2.msra.mxu0 %v2289
    %2368 = vmatprep.subr.mxu0 0.0
    %2369 = vmatpush2.msra.mxu0 %v2288
    %2370 = vmatprep.subr.mxu0 0.0
    %2371 = vmatpush2.msra.mxu0 %v2287
    %2372 = vmatprep.subr.mxu0 0.0
    %2373 = vmatpush2.msra.mxu0 %v2286
    %2374 = vmatprep.subr.mxu0 0.0
    %2375 = vmatpush2.msra.mxu0 %v2285
    %2376 = vmatprep.subr.mxu0 0.0
    %2377 = vmatpush2.msra.mxu0 %v2284
    %2378 = vmatprep.subr.mxu0 0.0
    %2379 = vmatpush2.msra.mxu0 %v2283
    %2380 = vmatprep.subr.mxu0 0.0
    %2381 = vmatpush2.msra.mxu0 %v2282
    %2382 = vmatprep.subr.mxu0 0.0
    %2383 = vmatpush2.msra.mxu0 %v2281
    %2384 = vmatprep.subr.mxu0 0.0
    %2385 = vmatpush2.msra.mxu0 %v2280
    %2386 = vmatprep.subr.mxu0 0.0
    %2387 = vmatpush2.msra.mxu0 %v2279
    %2388 = vmatprep.subr.mxu0 0.0
    %2389 = vmatpush2.msra.mxu0 %v2278
    %2390 = vmatprep.mubr.f32.mxu0 %v2183
    %2391 = vmatmul.mubr.f32.gmra.mxu0 %v2182
    %v2392 = vpop.f32.mrf.mxu0
    %v2393 = vadd.f32 0.0, %v2392
    %v2394 = vpop.f32.mrf.mxu0
    %2395 = vmatprep.mubr.f32.mxu0 %v2187
    %2396 = vmatmul.mubr.f32.gmra.mxu0 %v2186
    %v2397 = vpop.f32.mrf.mxu0
    %v2398 = vadd.f32 0.0, %v2397
    %v2399 = vpop.f32.mrf.mxu0
    %2400 = vmatprep.mubr.f32.mxu0 %v2191
    %2401 = vmatmul.mubr.f32.gmra.mxu0 %v2190
    %v2402 = vpop.f32.mrf.mxu0
    %v2403 = vadd.f32 0.0, %v2402
    %v2404 = vpop.f32.mrf.mxu0
    %2405 = vmatprep.mubr.f32.mxu0 %v2195
    %2406 = vmatmul.mubr.f32.gmra.mxu0 %v2194
    %v2407 = vpop.f32.mrf.mxu0
    %v2408 = vadd.f32 0.0, %v2407
    %v2409 = vpop.f32.mrf.mxu0
    %2410 = vmatprep.mubr.f32.mxu0 %v2199
    %2411 = vmatmul.mubr.f32.gmra.mxu0 %v2198
    %v2412 = vpop.f32.mrf.mxu0
    %v2413 = vadd.f32 0.0, %v2412
    %v2414 = vpop.f32.mrf.mxu0
    %2415 = vmatprep.mubr.f32.mxu0 %v2203
    %2416 = vmatmul.mubr.f32.gmra.mxu0 %v2202
    %v2417 = vpop.f32.mrf.mxu0
    %v2418 = vadd.f32 0.0, %v2417
    %v2419 = vpop.f32.mrf.mxu0
    %2420 = vmatprep.mubr.f32.mxu0 %v2207
    %2421 = vmatmul.mubr.f32.gmra.mxu0 %v2206
    %v2422 = vpop.f32.mrf.mxu0
    %v2423 = vadd.f32 0.0, %v2422
    %v2424 = vpop.f32.mrf.mxu0
    %2425 = vmatprep.mubr.f32.mxu0 %v2211
    %2426 = vmatmul.mubr.f32.gmra.mxu0 %v2210
    %v2427 = vpop.f32.mrf.mxu0
    %v2428 = vadd.f32 0.0, %v2427
    %v2429 = vpop.f32.mrf.mxu0
    %2430 = vmatprep.mubr.f32.mxu0 %v2215
    %2431 = vmatmul.mubr.f32.gmra.mxu0 %v2214
    %v2432 = vpop.f32.mrf.mxu0
    %v2433 = vadd.f32 0.0, %v2432
    %v2434 = vpop.f32.mrf.mxu0
    %2435 = vmatprep.mubr.f32.mxu0 %v2219
    %2436 = vmatmul.mubr.f32.gmra.mxu0 %v2218
    %v2437 = vpop.f32.mrf.mxu0
    %v2438 = vadd.f32 0.0, %v2437
    %v2439 = vpop.f32.mrf.mxu0
    %2440 = vmatprep.mubr.f32.mxu0 %v2223
    %2441 = vmatmul.mubr.f32.gmra.mxu0 %v2222
    %v2442 = vpop.f32.mrf.mxu0
    %v2443 = vadd.f32 0.0, %v2442
    %v2444 = vpop.f32.mrf.mxu0
    %2445 = vmatprep.mubr.f32.mxu0 %v2227
    %2446 = vmatmul.mubr.f32.gmra.mxu0 %v2226
    %v2447 = vpop.f32.mrf.mxu0
    %v2448 = vadd.f32 0.0, %v2447
    %v2449 = vpop.f32.mrf.mxu0
    %2450 = vmatprep.mubr.f32.mxu0 %v2231
    %2451 = vmatmul.mubr.f32.gmra.mxu0 %v2230
    %v2452 = vpop.f32.mrf.mxu0
    %v2453 = vadd.f32 0.0, %v2452
    %v2454 = vpop.f32.mrf.mxu0
    %2455 = vmatprep.mubr.f32.mxu0 %v2235
    %2456 = vmatmul.mubr.f32.gmra.mxu0 %v2234
    %v2457 = vpop.f32.mrf.mxu0
    %v2458 = vadd.f32 0.0, %v2457
    %v2459 = vpop.f32.mrf.mxu0
    %2460 = vmatprep.mubr.f32.mxu0 %v2239
    %2461 = vmatmul.mubr.f32.gmra.mxu0 %v2238
    %v2462 = vpop.f32.mrf.mxu0
    %v2463 = vadd.f32 0.0, %v2462
    %v2464 = vpop.f32.mrf.mxu0
    %2465 = vmatprep.mubr.f32.mxu0 %v2243
    %2466 = vmatmul.mubr.f32.gmra.mxu0 %v2242
    %v2467 = vpop.f32.mrf.mxu0
    %v2468 = vadd.f32 0.0, %v2467
    %v2469 = vpop.f32.mrf.mxu0
    %2470 = vdwg.mxu0
    %2471 = vmatprep.subr.mxu0 0.0
    %2472 = vmatpush1.msra.mxu0 %v2309
    %2473 = vmatprep.subr.mxu0 0.0
    %2474 = vmatpush1.msra.mxu0 %v2308
    %2475 = vmatprep.subr.mxu0 0.0
    %2476 = vmatpush1.msra.mxu0 %v2307
    %2477 = vmatprep.subr.mxu0 0.0
    %2478 = vmatpush1.msra.mxu0 %v2306
    %2479 = vmatprep.subr.mxu0 0.0
    %2480 = vmatpush1.msra.mxu0 %v2305
    %2481 = vmatprep.subr.mxu0 0.0
    %2482 = vmatpush1.msra.mxu0 %v2304
    %2483 = vmatprep.subr.mxu0 0.0
    %2484 = vmatpush1.msra.mxu0 %v2303
    %2485 = vmatprep.subr.mxu0 0.0
    %2486 = vmatpush1.msra.mxu0 %v2302
    %2487 = vmatprep.subr.mxu0 0.0
    %2488 = vmatpush1.msra.mxu0 %v2301
    %2489 = vmatprep.subr.mxu0 0.0
    %2490 = vmatpush1.msra.mxu0 %v2300
    %2491 = vmatprep.subr.mxu0 0.0
    %2492 = vmatpush1.msra.mxu0 %v2299
    %2493 = vmatprep.subr.mxu0 0.0
    %2494 = vmatpush1.msra.mxu0 %v2298
    %2495 = vmatprep.subr.mxu0 0.0
    %2496 = vmatpush1.msra.mxu0 %v2297
    %2497 = vmatprep.subr.mxu0 0.0
    %2498 = vmatpush1.msra.mxu0 %v2296
    %2499 = vmatprep.subr.mxu0 0.0
    %2500 = vmatpush1.msra.mxu0 %v2295
    %2501 = vmatprep.subr.mxu0 0.0
    %2502 = vmatpush1.msra.mxu0 %v2294
    %2503 = vmatprep.subr.mxu0 0.0
    %2504 = vmatpush2.msra.mxu0 %v2325
    %2505 = vmatprep.subr.mxu0 0.0
    %2506 = vmatpush2.msra.mxu0 %v2324
    %2507 = vmatprep.subr.mxu0 0.0
    %2508 = vmatpush2.msra.mxu0 %v2323
    %2509 = vmatprep.subr.mxu0 0.0
    %2510 = vmatpush2.msra.mxu0 %v2322
    %2511 = vmatprep.subr.mxu0 0.0
    %2512 = vmatpush2.msra.mxu0 %v2321
    %2513 = vmatprep.subr.mxu0 0.0
    %2514 = vmatpush2.msra.mxu0 %v2320
    %2515 = vmatprep.subr.mxu0 0.0
    %2516 = vmatpush2.msra.mxu0 %v2319
    %2517 = vmatprep.subr.mxu0 0.0
    %2518 = vmatpush2.msra.mxu0 %v2318
    %2519 = vmatprep.subr.mxu0 0.0
    %2520 = vmatpush2.msra.mxu0 %v2317
    %2521 = vmatprep.subr.mxu0 0.0
    %2522 = vmatpush2.msra.mxu0 %v2316
    %2523 = vmatprep.subr.mxu0 0.0
    %2524 = vmatpush2.msra.mxu0 %v2315
    %2525 = vmatprep.subr.mxu0 0.0
    %2526 = vmatpush2.msra.mxu0 %v2314
    %2527 = vmatprep.subr.mxu0 0.0
    %2528 = vmatpush2.msra.mxu0 %v2313
    %2529 = vmatprep.subr.mxu0 0.0
    %2530 = vmatpush2.msra.mxu0 %v2312
    %2531 = vmatprep.subr.mxu0 0.0
    %2532 = vmatpush2.msra.mxu0 %v2311
    %2533 = vmatprep.subr.mxu0 0.0
    %2534 = vmatpush2.msra.mxu0 %v2310
    %2535 = vmatprep.mubr.f32.mxu0 %v2185
    %2536 = vmatmul.mubr.f32.gmra.mxu0 %v2184
    %v2537 = vpop.f32.mrf.mxu0
    %v2538 = vadd.f32 %v2393, %v2537
    %v2539 = vpop.f32.mrf.mxu0
    %2540 = vmatprep.mubr.f32.mxu0 %v2189
    %2541 = vmatmul.mubr.f32.gmra.mxu0 %v2188
    %v2542 = vpop.f32.mrf.mxu0
    %v2543 = vadd.f32 %v2398, %v2542
    %v2544 = vpop.f32.mrf.mxu0
    %2545 = vmatprep.mubr.f32.mxu0 %v2193
    %2546 = vmatmul.mubr.f32.gmra.mxu0 %v2192
    %v2547 = vpop.f32.mrf.mxu0
    %v2548 = vadd.f32 %v2403, %v2547
    %v2549 = vpop.f32.mrf.mxu0
    %2550 = vmatprep.mubr.f32.mxu0 %v2197
    %2551 = vmatmul.mubr.f32.gmra.mxu0 %v2196
    %v2552 = vpop.f32.mrf.mxu0
    %v2553 = vadd.f32 %v2408, %v2552
    %v2554 = vpop.f32.mrf.mxu0
    %2555 = vmatprep.mubr.f32.mxu0 %v2201
    %2556 = vmatmul.mubr.f32.gmra.mxu0 %v2200
    %v2557 = vpop.f32.mrf.mxu0
    %v2558 = vadd.f32 %v2413, %v2557
    %v2559 = vpop.f32.mrf.mxu0
    %2560 = vmatprep.mubr.f32.mxu0 %v2205
    %2561 = vmatmul.mubr.f32.gmra.mxu0 %v2204
    %v2562 = vpop.f32.mrf.mxu0
    %v2563 = vadd.f32 %v2418, %v2562
    %v2564 = vpop.f32.mrf.mxu0
    %2565 = vmatprep.mubr.f32.mxu0 %v2209
    %2566 = vmatmul.mubr.f32.gmra.mxu0 %v2208
    %v2567 = vpop.f32.mrf.mxu0
    %v2568 = vadd.f32 %v2423, %v2567
    %v2569 = vpop.f32.mrf.mxu0
    %2570 = vmatprep.mubr.f32.mxu0 %v2213
    %2571 = vmatmul.mubr.f32.gmra.mxu0 %v2212
    %v2572 = vpop.f32.mrf.mxu0
    %v2573 = vadd.f32 %v2428, %v2572
    %v2574 = vpop.f32.mrf.mxu0
    %2575 = vmatprep.mubr.f32.mxu0 %v2217
    %2576 = vmatmul.mubr.f32.gmra.mxu0 %v2216
    %v2577 = vpop.f32.mrf.mxu0
    %v2578 = vadd.f32 %v2433, %v2577
    %v2579 = vpop.f32.mrf.mxu0
    %2580 = vmatprep.mubr.f32.mxu0 %v2221
    %2581 = vmatmul.mubr.f32.gmra.mxu0 %v2220
    %v2582 = vpop.f32.mrf.mxu0
    %v2583 = vadd.f32 %v2438, %v2582
    %v2584 = vpop.f32.mrf.mxu0
    %2585 = vmatprep.mubr.f32.mxu0 %v2225
    %2586 = vmatmul.mubr.f32.gmra.mxu0 %v2224
    %v2587 = vpop.f32.mrf.mxu0
    %v2588 = vadd.f32 %v2443, %v2587
    %v2589 = vpop.f32.mrf.mxu0
    %2590 = vmatprep.mubr.f32.mxu0 %v2229
    %2591 = vmatmul.mubr.f32.gmra.mxu0 %v2228
    %v2592 = vpop.f32.mrf.mxu0
    %v2593 = vadd.f32 %v2448, %v2592
    %v2594 = vpop.f32.mrf.mxu0
    %2595 = vmatprep.mubr.f32.mxu0 %v2233
    %2596 = vmatmul.mubr.f32.gmra.mxu0 %v2232
    %v2597 = vpop.f32.mrf.mxu0
    %v2598 = vadd.f32 %v2453, %v2597
    %v2599 = vpop.f32.mrf.mxu0
    %2600 = vmatprep.mubr.f32.mxu0 %v2237
    %2601 = vmatmul.mubr.f32.gmra.mxu0 %v2236
    %v2602 = vpop.f32.mrf.mxu0
    %v2603 = vadd.f32 %v2458, %v2602
    %v2604 = vpop.f32.mrf.mxu0
    %2605 = vmatprep.mubr.f32.mxu0 %v2241
    %2606 = vmatmul.mubr.f32.gmra.mxu0 %v2240
    %v2607 = vpop.f32.mrf.mxu0
    %v2608 = vadd.f32 %v2463, %v2607
    %v2609 = vpop.f32.mrf.mxu0
    %2610 = vmatprep.mubr.f32.mxu0 %v2245
    %2611 = vmatmul.mubr.f32.gmra.mxu0 %v2244
    %v2612 = vpop.f32.mrf.mxu0
    %v2613 = vadd.f32 %v2468, %v2612
    %v2614 = vpop.f32.mrf.mxu0
    %2615 = vdwg.mxu0
    %v2616 = vadd.f32 %v2246, %v2538
    %v2617 = vadd.f32 %v2247, %v2543
    %v2618 = vadd.f32 %v2248, %v2548
    %v2619 = vadd.f32 %v2249, %v2553
    %v2620 = vadd.f32 %v2250, %v2558
    %v2621 = vadd.f32 %v2251, %v2563
    %v2622 = vadd.f32 %v2252, %v2568
    %v2623 = vadd.f32 %v2253, %v2573
    %v2624 = vadd.f32 %v2254, %v2578
    %v2625 = vadd.f32 %v2255, %v2583
    %v2626 = vadd.f32 %v2256, %v2588
    %v2627 = vadd.f32 %v2257, %v2593
    %v2628 = vadd.f32 %v2258, %v2598
    %v2629 = vadd.f32 %v2259, %v2603
    %v2630 = vadd.f32 %v2260, %v2608
    %v2631 = vadd.f32 %v2261, %v2613
    %2632 = vst [vmem:[#allocation2] sm:$0xff] %v2616
    %2633 = vst [vmem:[#allocation2 + $0x8] sm:$0xff] %v2617
    %2634 = vst [vmem:[#allocation2 + $0x10] sm:$0xff] %v2618
    %2635 = vst [vmem:[#allocation2 + $0x18] sm:$0xff] %v2619
    %2636 = vst [vmem:[#allocation2 + $0x20] sm:$0xff] %v2620
    %2637 = vst [vmem:[#allocation2 + $0x28] sm:$0xff] %v2621
    %2638 = vst [vmem:[#allocation2 + $0x30] sm:$0xff] %v2622
    %2639 = vst [vmem:[#allocation2 + $0x38] sm:$0xff] %v2623
    %2640 = vst [vmem:[#allocation2 + $0x40] sm:$0xff] %v2624
    %2641 = vst [vmem:[#allocation2 + $0x48] sm:$0xff] %v2625
    %2642 = vst [vmem:[#allocation2 + $0x50] sm:$0xff] %v2626
    %2643 = vst [vmem:[#allocation2 + $0x58] sm:$0xff] %v2627
    %2644 = vst [vmem:[#allocation2 + $0x60] sm:$0xff] %v2628
    %2645 = vst [vmem:[#allocation2 + $0x68] sm:$0xff] %v2629
    %2646 = vst [vmem:[#allocation2 + $0x70] sm:$0xff] %v2630
    %2647 = vst [vmem:[#allocation2 + $0x78] sm:$0xff] %v2631
    // Predicated region
    $region42: #{tpu_custom_call.1} parent=1 // pred_check
      %p2648 = pneg %p74
    $region43: #{tpu_custom_call.1} parent=1 // pred_check_branch
      %2650 = sbr.rel (%p2648) target = $region45
    $region44: #{tpu_custom_call.1} parent=1 // pred_region
      %v2651 = vld [vmem:[#allocation2] sm:$0xff]
      %v2652 = vld [vmem:[#allocation2 + $0x8] sm:$0xff]
      %v2653 = vld [vmem:[#allocation2 + $0x10] sm:$0xff]
      %v2654 = vld [vmem:[#allocation2 + $0x18] sm:$0xff]
      %v2655 = vld [vmem:[#allocation2 + $0x20] sm:$0xff]
      %v2656 = vld [vmem:[#allocation2 + $0x28] sm:$0xff]
      %v2657 = vld [vmem:[#allocation2 + $0x30] sm:$0xff]
      %v2658 = vld [vmem:[#allocation2 + $0x38] sm:$0xff]
      %v2659 = vld [vmem:[#allocation2 + $0x40] sm:$0xff]
      %v2660 = vld [vmem:[#allocation2 + $0x48] sm:$0xff]
      %v2661 = vld [vmem:[#allocation2 + $0x50] sm:$0xff]
      %v2662 = vld [vmem:[#allocation2 + $0x58] sm:$0xff]
      %v2663 = vld [vmem:[#allocation2 + $0x60] sm:$0xff]
      %v2664 = vld [vmem:[#allocation2 + $0x68] sm:$0xff]
      %v2665 = vld [vmem:[#allocation2 + $0x70] sm:$0xff]
      %v2666 = vld [vmem:[#allocation2 + $0x78] sm:$0xff]
      %v2667 = vld [vmem:[%s4] sm:$0x1]
      %v2669 = vlaneseq
      %v2670 = vshrl.u32 %v2669, 7
      %v2671 = vsub.s32 0, %v2670
      %v2672 = vrot.slane %v2667, %v2671
      %v2674 = vadd.f32 %v2651, %v2672
      %v2675 = vadd.f32 %v2652, %v2672
      %v2676 = vadd.f32 %v2653, %v2672
      %v2677 = vadd.f32 %v2654, %v2672
      %v2678 = vadd.f32 %v2655, %v2672
      %v2679 = vadd.f32 %v2656, %v2672
      %v2680 = vadd.f32 %v2657, %v2672
      %v2681 = vadd.f32 %v2658, %v2672
      %v2682 = vadd.f32 %v2659, %v2672
      %v2683 = vadd.f32 %v2660, %v2672
      %v2684 = vadd.f32 %v2661, %v2672
      %v2685 = vadd.f32 %v2662, %v2672
      %v2686 = vadd.f32 %v2663, %v2672
      %v2687 = vadd.f32 %v2664, %v2672
      %v2688 = vadd.f32 %v2665, %v2672
      %v2689 = vadd.f32 %v2666, %v2672
      %2690 = vst [vmem:[#allocation11] sm:$0xff] %v2674
      %2691 = vst [vmem:[#allocation11 + $0x8] sm:$0xff] %v2675
      %2692 = vst [vmem:[#allocation11 + $0x10] sm:$0xff] %v2676
      %2693 = vst [vmem:[#allocation11 + $0x18] sm:$0xff] %v2677
      %2694 = vst [vmem:[#allocation11 + $0x20] sm:$0xff] %v2678
      %2695 = vst [vmem:[#allocation11 + $0x28] sm:$0xff] %v2679
      %2696 = vst [vmem:[#allocation11 + $0x30] sm:$0xff] %v2680
      %2697 = vst [vmem:[#allocation11 + $0x38] sm:$0xff] %v2681
      %2698 = vst [vmem:[#allocation11 + $0x40] sm:$0xff] %v2682
      %2699 = vst [vmem:[#allocation11 + $0x48] sm:$0xff] %v2683
      %2700 = vst [vmem:[#allocation11 + $0x50] sm:$0xff] %v2684
      %2701 = vst [vmem:[#allocation11 + $0x58] sm:$0xff] %v2685
      %2702 = vst [vmem:[#allocation11 + $0x60] sm:$0xff] %v2686
      %2703 = vst [vmem:[#allocation11 + $0x68] sm:$0xff] %v2687
      %2704 = vst [vmem:[#allocation11 + $0x70] sm:$0xff] %v2688
      %2705 = vst [vmem:[#allocation11 + $0x78] sm:$0xff] %v2689
    $region45: #{tpu_custom_call.1} parent=1 // pred_fallthru
      _
    // Predicated region
    $region46: #{tpu_custom_call.1} parent=1 // pred_check
      _
    $region47: #{tpu_custom_call.1} parent=1 // pred_check_branch
      %2707 = sbr.rel (0) target = $region49
    $region48: #{tpu_custom_call.1} parent=1 // pred_region
      %s2709 = ssub.s32 2048, 2048
      %2710 = vsyncadd [#allocation5], %s2709
      %s2711 = sshll.u32 [#allocation11], 4
      %s2712 = int_to_ptr.vmem [resolvable:$true] %s2711
      %2717 = dma.vmem_to_hbm [thread:$0]  %s2712, 2048, %s5, [#allocation5], 128, 128, 8
    $region49: #{tpu_custom_call.1} parent=1 // pred_fallthru
      _
    // Predicated region
    $region50: #{tpu_custom_call.1} parent=1 // pred_check
      _
    $region51: #{tpu_custom_call.1} parent=1 // pred_check_branch
      %2719 = sbr.rel (0) target = $region53
    $region52: #{tpu_custom_call.1} parent=1 // pred_region
      %2720 = dma.done [#allocation5], 2048
    $region53: #{tpu_custom_call.1} parent=1 // pred_fallthru
      _
    %2721 = vsyncpa [#allocation4], 1
    %2722 = vsyncpa [#allocation7], 1
    %2723 = vsyncpa [#allocation10], 1
    %2724 = vsyncpa [#allocation5], 1

</llo_original>
